<compile_context>
chip_gen: v7x
topology: tpu7x:2x2x1
jax: 0.10.0
libtpu: 0.0.40
codegen_flags: <defaults>
</compile_context>

<pallas_src>
import functools
import math

import jax
import jax.numpy as jnp
from jax.experimental import pallas as pl
from jax.experimental.pallas import tpu as pltpu


VMEM_LIMIT = 32 * 1024 * 1024  # safe on v5e/v6e and v7x (64 MiB physical VMEM)


def _row_tile(m):
    """Largest aligned row tile dividing m (keeps double-buffered tiles small)."""
    for t in (512, 256, 128, 64, 32, 16, 8):
        if m % t == 0:
            return t
    return m


def _mosaic_params(*sem):
    return pltpu.CompilerParams(dimension_semantics=sem,
                                vmem_limit_bytes=VMEM_LIMIT)


# ----------------------------------------------------------------------------
# Fused multi-output projection:  x @ [W_a | W_b | ...] + b  ->  (a, b, ...)
# ----------------------------------------------------------------------------

def _fused_proj_kernel(x_ref, w_ref, b_ref, *out_refs, out_dim):
    # x: (tm, K); w: (K, n*out_dim); b: (1, n*out_dim)
    y = jnp.dot(x_ref[...], w_ref[...], preferred_element_type=jnp.float32) + b_ref[...]
    for i, o_ref in enumerate(out_refs):
        o_ref[...] = y[:, i * out_dim:(i + 1) * out_dim].astype(o_ref.dtype)


def fused_proj(x, w, b, n_out):
    """x:(M,K) @ w:(K, n_out*N) + b -> tuple of n_out arrays (M, N)."""
    M, K = x.shape
    N = w.shape[1] // n_out
    tm = _row_tile(M)
    # TODO(synk): for very large K, add a K-reduction grid axis with a VMEM
    # f32 accumulator (worked-matmul pattern) instead of whole-K blocks.
    flops = 2 * M * K * n_out * N
    bytes_acc = 4 * (M * K + K * n_out * N + n_out * N + M * n_out * N)
    return pl.pallas_call(
        functools.partial(_fused_proj_kernel, out_dim=N),
        grid=(M // tm,),
        in_specs=[
            pl.BlockSpec((tm, K), lambda i: (i, 0)),
            pl.BlockSpec((K, n_out * N), lambda i: (0, 0)),
            pl.BlockSpec((1, n_out * N), lambda i: (0, 0)),
        ],
        out_specs=tuple(pl.BlockSpec((tm, N), lambda i: (i, 0)) for _ in range(n_out)),
        out_shape=tuple(jax.ShapeDtypeStruct((M, N), x.dtype) for _ in range(n_out)),
        compiler_params=_mosaic_params("parallel"),
        cost_estimate=pl.CostEstimate(flops=flops, transcendentals=0,
                                      bytes_accessed=bytes_acc),
    )(x, w, b.reshape(1, -1))


# ----------------------------------------------------------------------------
# Attention core: per-batch grid step, all heads inside, lane-dense output
# ----------------------------------------------------------------------------

def _attention_kernel(q_ref, k_ref, v_ref, m_ref, o_ref, *, n_heads, head_dim, scale):
    # q: (1,Sq,dim); k/v: (1,Sk,dim); mask: (1,1,Sq,Sk); o: (1,Sq,dim)
    q = q_ref[0].astype(jnp.float32)            # (Sq, dim)
    k = k_ref[0].astype(jnp.float32)            # (Sk, dim)
    v = v_ref[0]                                # (Sk, dim)
    mask = m_ref[0, 0]                          # (Sq, Sk)
    neg = jnp.float32(-1e9)
    # TODO(synk): for long Sk, tile Sk with an online-softmax (flash) loop
    # instead of materializing the full (Sq, Sk) score matrix.
    for h in range(n_heads):                    # all heads in one grid step
        lo = h * head_dim
        hi = lo + head_dim
        qh = q[:, lo:hi]                        # (Sq, hd)
        kh = k[:, lo:hi]                        # (Sk, hd)
        vh = v[:, lo:hi]                        # (Sk, hd)
        # contract head_dim of both operands (no explicit K transpose)
        s = jax.lax.dot_general(qh, kh, (((1,), (1,)), ((), ())),
                                preferred_element_type=jnp.float32) * scale
        s = jnp.where(mask == 0, neg, s)        # masked_fill_(mask == 0, -1e9)
        s = s - jnp.max(s, axis=-1, keepdims=True)
        p = jnp.exp(s)
        p = p * pl.reciprocal(jnp.sum(p, axis=-1, keepdims=True), approx=True)
        oh = jnp.dot(p.astype(vh.dtype), vh, preferred_element_type=jnp.float32)
        # store head slice into the lane-dense (Sq, dim) output block
        o_ref[0, :, lo:hi] = oh.astype(o_ref.dtype)


def attention_core(q, k, v, mask, n_heads):
    """q:(B,Sq,dim), k/v:(B,Sk,dim), mask:(B,1,Sq,Sk) -> (B,Sq,dim)."""
    B, Sq, dim = q.shape
    Sk = k.shape[1]
    hd = dim // n_heads
    flops = 4 * B * Sq * Sk * dim
    bytes_acc = 4 * (2 * B * Sq * dim + 2 * B * Sk * dim + B * Sq * Sk)
    return pl.pallas_call(
        functools.partial(_attention_kernel, n_heads=n_heads, head_dim=hd,
                          scale=1.0 / math.sqrt(hd)),
        grid=(B,),
        in_specs=[
            pl.BlockSpec((1, Sq, dim), lambda b: (b, 0, 0)),
            pl.BlockSpec((1, Sk, dim), lambda b: (b, 0, 0)),
            pl.BlockSpec((1, Sk, dim), lambda b: (b, 0, 0)),
            pl.BlockSpec((1, 1, Sq, Sk), lambda b: (b, 0, 0, 0)),
        ],
        out_specs=pl.BlockSpec((1, Sq, dim), lambda b: (b, 0, 0)),
        out_shape=jax.ShapeDtypeStruct((B, Sq, dim), q.dtype),
        compiler_params=_mosaic_params("parallel"),
        cost_estimate=pl.CostEstimate(flops=flops,
                                      transcendentals=B * n_heads * Sq * Sk,
                                      bytes_accessed=bytes_acc),
    )(q, k, v, mask)


# ----------------------------------------------------------------------------
# Output projection fused with residual-add + RMSNorm epilogue
# ----------------------------------------------------------------------------

def _proj_addnorm_kernel(x_ref, w_ref, b_ref, r_ref, g_ref, o_ref, *, eps):
    h = jnp.dot(x_ref[...], w_ref[...], preferred_element_type=jnp.float32) + b_ref[...]
    h = h + r_ref[...].astype(jnp.float32)                   # residual
    ms = jnp.mean(h * h, axis=-1, keepdims=True)             # RMSNorm
    o_ref[...] = (h * jax.lax.rsqrt(ms + eps) * g_ref[...]).astype(o_ref.dtype)


def proj_addnorm(x, w, b, resid, g, eps):
    M, K = x.shape
    N = w.shape[1]
    tm = _row_tile(M)
    flops = 2 * M * K * N + 6 * M * N
    bytes_acc = 4 * (M * K + K * N + N + 2 * M * N + N)
    return pl.pallas_call(
        functools.partial(_proj_addnorm_kernel, eps=eps),
        grid=(M // tm,),
        in_specs=[
            pl.BlockSpec((tm, K), lambda i: (i, 0)),
            pl.BlockSpec((K, N), lambda i: (0, 0)),
            pl.BlockSpec((1, N), lambda i: (0, 0)),
            pl.BlockSpec((tm, N), lambda i: (i, 0)),
            pl.BlockSpec((1, N), lambda i: (0, 0)),
        ],
        out_specs=pl.BlockSpec((tm, N), lambda i: (i, 0)),
        out_shape=jax.ShapeDtypeStruct((M, N), x.dtype),
        compiler_params=_mosaic_params("parallel"),
        cost_estimate=pl.CostEstimate(flops=flops, transcendentals=M,
                                      bytes_accessed=bytes_acc),
    )(x, w, b.reshape(1, -1), resid, g.reshape(1, -1))


# ----------------------------------------------------------------------------
# FFN (linear -> relu -> linear) fused with residual-add + RMSNorm
# ----------------------------------------------------------------------------

def _ffn_addnorm_kernel(x_ref, w1_ref, b1_ref, w2_ref, b2_ref, g_ref, o_ref, *, eps):
    x = x_ref[...]
    h = jnp.dot(x, w1_ref[...], preferred_element_type=jnp.float32) + b1_ref[...]
    h = jnp.maximum(h, 0.0).astype(x.dtype)                  # ReLU (dropout == identity)
    h = jnp.dot(h, w2_ref[...], preferred_element_type=jnp.float32) + b2_ref[...]
    h = h + x.astype(jnp.float32)                            # residual
    ms = jnp.mean(h * h, axis=-1, keepdims=True)             # RMSNorm
    o_ref[...] = (h * jax.lax.rsqrt(ms + eps) * g_ref[...]).astype(o_ref.dtype)


def ffn_addnorm(x, w1, b1, w2, b2, g, eps):
    M, D = x.shape
    H = w1.shape[1]
    tm = _row_tile(M)
    # TODO(synk): for large D/H, add a K-reduction grid axis with a VMEM f32
    # accumulator and re-derive tm against v7x's 64 MiB VMEM.
    flops = 4 * M * D * H + 8 * M * D
    bytes_acc = 4 * (2 * M * D + 2 * D * H + H + 2 * D)
    return pl.pallas_call(
        functools.partial(_ffn_addnorm_kernel, eps=eps),
        grid=(M // tm,),
        in_specs=[
            pl.BlockSpec((tm, D), lambda i: (i, 0)),
            pl.BlockSpec((D, H), lambda i: (0, 0)),
            pl.BlockSpec((1, H), lambda i: (0, 0)),
            pl.BlockSpec((H, D), lambda i: (0, 0)),
            pl.BlockSpec((1, D), lambda i: (0, 0)),
            pl.BlockSpec((1, D), lambda i: (0, 0)),
        ],
        out_specs=pl.BlockSpec((tm, D), lambda i: (i, 0)),
        out_shape=jax.ShapeDtypeStruct((M, D), x.dtype),
        compiler_params=_mosaic_params("parallel"),
        cost_estimate=pl.CostEstimate(flops=flops, transcendentals=M,
                                      bytes_accessed=bytes_acc),
    )(x, w1, b1.reshape(1, -1), w2, b2.reshape(1, -1), g.reshape(1, -1))


# ----------------------------------------------------------------------------
# DecoderLayer forward (8 pallas_calls per layer)
# ----------------------------------------------------------------------------

def decoder_layer(params, x, y, d_mask, padding_mask, *, n_heads, eps):
    """x: (B, Sx, dim) decoder stream; y: (B, Sy, dim) encoder output.
    d_mask: (B, 1, Sx, Sx); padding_mask: (B, 1, Sx, Sy)."""
    B, Sx, dim = x.shape
    Sy = y.shape[1]
    x2 = x.reshape(B * Sx, dim)
    y2 = y.reshape(B * Sy, dim)
    a1, a2 = params["attn1"], params["attn2"]

    # self-attention block (dropout1 == identity in eval)
    q1, k1, v1 = fused_proj(x2, a1["wqkv_w"], a1["wqkv_b"], n_out=3)
    ctx1 = attention_core(q1.reshape(B, Sx, dim), k1.reshape(B, Sx, dim),
                          v1.reshape(B, Sx, dim), d_mask, n_heads)
    an1 = proj_addnorm(ctx1.reshape(B * Sx, dim), a1["wo_w"], a1["wo_b"],
                       x2, params["norm1_w"], eps)

    # cross-attention block (dropout2 == identity in eval)
    (q2,) = fused_proj(an1, a2["wq_w"], a2["wq_b"], n_out=1)
    k2, v2 = fused_proj(y2, a2["wkv_w"], a2["wkv_b"], n_out=2)
    ctx2 = attention_core(q2.reshape(B, Sx, dim), k2.reshape(B, Sy, dim),
                          v2.reshape(B, Sy, dim), padding_mask, n_heads)
    an2 = proj_addnorm(ctx2.reshape(B * Sx, dim), a2["wo_w"], a2["wo_b"],
                       an1, params["norm2_w"], eps)

    # feed-forward block (dropout3 == identity in eval)
    out = ffn_addnorm(an2, params["ff_w1"], params["ff_b1"],
                      params["ff_w2"], params["ff_b2"], params["norm3_w"], eps)
    return out.reshape(B, Sx, dim)


# ----------------------------------------------------------------------------
# Deterministic parameter init (fused weight layout; shapes from __init__)
# ----------------------------------------------------------------------------

def _init_attn_params(key, dim):
    ks = jax.random.split(key, 8)
    s = 0.02
    wq = s * jax.random.normal(ks[0], (dim, dim), jnp.float32)
    bq = s * jax.random.normal(ks[1], (dim,), jnp.float32)
    wk = s * jax.random.normal(ks[2], (dim, dim), jnp.float32)
    bk = s * jax.random.normal(ks[3], (dim,), jnp.float32)
    wv = s * jax.random.normal(ks[4], (dim, dim), jnp.float32)
    bv = s * jax.random.normal(ks[5], (dim,), jnp.float32)
    wo = s * jax.random.normal(ks[6], (dim, dim), jnp.float32)
    bo = s * jax.random.normal(ks[7], (dim,), jnp.float32)
    return {
        # fused projection weights ([in, out]; x @ W + b == torch x @ W.T + b)
        "wqkv_w": jnp.concatenate([wq, wk, wv], axis=1),
        "wqkv_b": jnp.concatenate([bq, bk, bv]),
        "wq_w": wq, "wq_b": bq,
        "wkv_w": jnp.concatenate([wk, wv], axis=1),
        "wkv_b": jnp.concatenate([bk, bv]),
        "wo_w": wo, "wo_b": bo,
    }


def init_decoder_params(key, dim, hidden_dim):
    ks = jax.random.split(key, 6)
    s = 0.02
    return {
        "attn1": _init_attn_params(ks[0], dim),
        "attn2": _init_attn_params(ks[1], dim),
        "norm1_w": jnp.ones((dim,), jnp.float32),
        "norm2_w": jnp.ones((dim,), jnp.float32),
        "norm3_w": jnp.ones((dim,), jnp.float32),
        "ff_w1": s * jax.random.normal(ks[2], (dim, hidden_dim), jnp.float32),
        "ff_b1": s * jax.random.normal(ks[3], (hidden_dim,), jnp.float32),
        "ff_w2": s * jax.random.normal(ks[4], (hidden_dim, dim), jnp.float32),
        "ff_b2": s * jax.random.normal(ks[5], (dim,), jnp.float32),
    }


# ----------------------------------------------------------------------------
# Pure-JAX reference (matches the PyTorch module semantics) for validation
# ----------------------------------------------------------------------------

def _ref_attention(q_in, k_in, v_in, mask, p, n_heads):
    B, Sq, dim = q_in.shape
    Sk = k_in.shape[1]
    hd = dim // n_heads
    q = q_in @ p["wq_w"] + p["wq_b"]
    k = k_in @ p["wkv_w"][:, :dim] + p["wkv_b"][:dim]
    v = v_in @ p["wkv_w"][:, dim:] + p["wkv_b"][dim:]
    q = q.reshape(B, Sq, n_heads, hd).transpose(0, 2, 1, 3)
    k = k.reshape(B, Sk, n_heads, hd).transpose(0, 2, 1, 3)
    v = v.reshape(B, Sk, n_heads, hd).transpose(0, 2, 1, 3)
    s = jnp.einsum("bhqd,bhkd->bhqk", q, k) / math.sqrt(hd)
    s = jnp.where(mask == 0, -1e9, s)
    a = jax.nn.softmax(s, axis=-1)
    o = jnp.einsum("bhqk,bhkd->bhqd", a, v)
    o = o.transpose(0, 2, 1, 3).reshape(B, Sq, dim)
    return o @ p["wo_w"] + p["wo_b"]


def _ref_rmsnorm(x, g, eps):
    return x * jax.lax.rsqrt(jnp.mean(x * x, axis=-1, keepdims=True) + eps) * g


def _ref_decoder(params, x, y, d_mask, padding_mask, n_heads, eps):
    mh1 = _ref_attention(x, x, x, d_mask, params["attn1"], n_heads)
    an1 = _ref_rmsnorm(x + mh1, params["norm1_w"], eps)
    mh2 = _ref_attention(an1, y, y, padding_mask, params["attn2"], n_heads)
    an2 = _ref_rmsnorm(an1 + mh2, params["norm2_w"], eps)
    ff = jnp.maximum(an2 @ params["ff_w1"] + params["ff_b1"], 0.0)
    ff = ff @ params["ff_w2"] + params["ff_b2"]
    return _ref_rmsnorm(an2 + ff, params["norm3_w"], eps)


# ----------------------------------------------------------------------------
# Main
# ----------------------------------------------------------------------------

if __name__ == "__main__":
    # small ModelConfig: dim=32, n_heads=4, hidden_dim=64, norm_eps=1e-5
    B, Sx, Sy, DIM, NH, HID = 2, 8, 8, 32, 4, 64
    EPS = 1e-5

    root = jax.random.PRNGKey(0)
    k_par, k_x, k_y = jax.random.split(root, 3)

    params = init_decoder_params(k_par, DIM, HID)

    x = jax.random.normal(k_x, (B, Sx, DIM), jnp.float32)   # decoder input
    y = jax.random.normal(k_y, (B, Sy, DIM), jnp.float32)   # encoder output

    # causal (look-ahead) mask for self-attention: 1 = keep, 0 = masked
    d_mask = jnp.broadcast_to(jnp.tril(jnp.ones((Sx, Sx), jnp.float32)),
                              (B, 1, Sx, Sx))
    # padding mask for cross-attention: mask last encoder position of batch 1
    key_valid = jnp.ones((B, Sy), jnp.float32).at[1, -1].set(0.0)
    padding_mask = jnp.broadcast_to(key_valid[:, None, None, :], (B, 1, Sx, Sy))

    fwd = jax.jit(functools.partial(decoder_layer, n_heads=NH, eps=EPS))
    out = fwd(params, x, y, d_mask, padding_mask)
    jax.block_until_ready(out)

    ref = _ref_decoder(params, x, y, d_mask, padding_mask, NH, EPS)
    err = float(jnp.max(jnp.abs(out - ref)))

    assert out.shape == (B, Sx, DIM) and out.dtype == jnp.float32
    assert bool(jnp.all(jnp.isfinite(out)))
    assert err < 5e-2, f"max abs err vs reference = {err}"
    print("KERNEL_OK")
</pallas_src>

<mosaic_0001>
module attributes {stable_mosaic.version = 11 : i64} {
  func.func @_fused_proj_kernel(%arg0: i32, %arg1: memref<16x32xf32, #tpu.memory_space<vmem>>, %arg2: memref<32x64xf32, #tpu.memory_space<vmem>>, %arg3: memref<1x64xf32, #tpu.memory_space<vmem>>, %arg4: memref<16x32xf32, #tpu.memory_space<vmem>>, %arg5: memref<16x32xf32, #tpu.memory_space<vmem>>) attributes {dimension_semantics = [#tpu.dimension_semantics<parallel>], iteration_bounds = array<i64: 1>, scalar_prefetch = 0 : i64, scratch_operands = 0 : i64, tpu.core_type = #tpu.core_type<tc>, window_params = [{transform_indices = @transform_0, window_bounds = array<i64: 16, 32>}, {pipeline_mode = #tpu.pipeline_mode<synchronous>, transform_indices = @transform_1, window_bounds = array<i64: 32, 64>}, {pipeline_mode = #tpu.pipeline_mode<synchronous>, transform_indices = @transform_2, window_bounds = array<i64: 1, 64>}, {transform_indices = @transform_3, window_bounds = array<i64: 16, 32>}, {transform_indices = @transform_4, window_bounds = array<i64: 16, 32>}]} {
    %c0 = arith.constant 0 : index
    %c0_0 = arith.constant 0 : index
    %0 = vector.load %arg1[%c0, %c0_0] : memref<16x32xf32, #tpu.memory_space<vmem>>, vector<16x32xf32>
    %c0_1 = arith.constant 0 : index
    %c0_2 = arith.constant 0 : index
    %1 = vector.load %arg2[%c0_1, %c0_2] : memref<32x64xf32, #tpu.memory_space<vmem>>, vector<32x64xf32>
    %cst = arith.constant dense<0.000000e+00> : vector<16x64xf32>
    %2 = tpu.matmul %0, %1, %cst {dimension_numbers = #tpu.dot_dimension_numbers<[1], [0], [0], [1], [0, 0, 1, 1], [], []>} : vector<16x32xf32>, vector<32x64xf32>, vector<16x64xf32> -> vector<16x64xf32>
    %c0_3 = arith.constant 0 : index
    %c0_4 = arith.constant 0 : index
    %3 = vector.load %arg3[%c0_3, %c0_4] : memref<1x64xf32, #tpu.memory_space<vmem>>, vector<1x64xf32>
    %4 = vector.broadcast %3 : vector<1x64xf32> to vector<16x64xf32>
    %5 = arith.addf %2, %4 : vector<16x64xf32>
    %6 = vector.extract_strided_slice %5 {offsets = [0, 0], sizes = [16, 32], strides = [1, 1]} : vector<16x64xf32> to vector<16x32xf32>
    %c0_5 = arith.constant 0 : index
    %c0_6 = arith.constant 0 : index
    %7 = vector.load %arg4[%c0_5, %c0_6] : memref<16x32xf32, #tpu.memory_space<vmem>>, vector<16x32xf32>
    tpu.vector_store %arg4[%c0_5, %c0_6], %6 {strides = array<i32>} : memref<16x32xf32, #tpu.memory_space<vmem>>, vector<16x32xf32>,
    %8 = vector.extract_strided_slice %5 {offsets = [0, 32], sizes = [16, 32], strides = [1, 1]} : vector<16x64xf32> to vector<16x32xf32>
    %c0_7 = arith.constant 0 : index
    %c0_8 = arith.constant 0 : index
    %9 = vector.load %arg5[%c0_7, %c0_8] : memref<16x32xf32, #tpu.memory_space<vmem>>, vector<16x32xf32>
    tpu.vector_store %arg5[%c0_7, %c0_8], %8 {strides = array<i32>} : memref<16x32xf32, #tpu.memory_space<vmem>>, vector<16x32xf32>,
    return
  }
  func.func @transform_0(%arg0: i32) -> (i32, i32) {
    %c0_i32 = arith.constant 0 : i32
    %c0_i32_0 = arith.constant 0 : i32
    return %arg0, %c0_i32 : i32, i32
  }
  func.func @transform_1(%arg0: i32) -> (i32, i32) {
    %c0_i32 = arith.constant 0 : i32
    %c0_i32_0 = arith.constant 0 : i32
    %c0_i32_1 = arith.constant 0 : i32
    return %c0_i32, %c0_i32_0 : i32, i32
  }
  func.func @transform_2(%arg0: i32) -> (i32, i32) {
    %c0_i32 = arith.constant 0 : i32
    %c0_i32_0 = arith.constant 0 : i32
    %c0_i32_1 = arith.constant 0 : i32
    return %c0_i32, %c0_i32_0 : i32, i32
  }
  func.func @transform_3(%arg0: i32) -> (i32, i32) {
    %c0_i32 = arith.constant 0 : i32
    %c0_i32_0 = arith.constant 0 : i32
    return %arg0, %c0_i32 : i32, i32
  }
  func.func @transform_4(%arg0: i32) -> (i32, i32) {
    %c0_i32 = arith.constant 0 : i32
    %c0_i32_0 = arith.constant 0 : i32
    return %arg0, %c0_i32 : i32, i32
  }
}

module attributes {stable_mosaic.version = 11 : i64} {
  func.func @_attention_kernel(%arg0: i32, %arg1: memref<1x8x32xf32, #tpu.memory_space<vmem>>, %arg2: memref<1x8x32xf32, #tpu.memory_space<vmem>>, %arg3: memref<1x8x32xf32, #tpu.memory_space<vmem>>, %arg4: memref<1x1x8x8xf32, #tpu.memory_space<vmem>>, %arg5: memref<1x8x32xf32, #tpu.memory_space<vmem>>) attributes {dimension_semantics = [#tpu.dimension_semantics<parallel>], iteration_bounds = array<i64: 2>, scalar_prefetch = 0 : i64, scratch_operands = 0 : i64, tpu.core_type = #tpu.core_type<tc>, window_params = [{transform_indices = @transform_0, window_bounds = array<i64: 1, 8, 32>}, {transform_indices = @transform_1, window_bounds = array<i64: 1, 8, 32>}, {transform_indices = @transform_2, window_bounds = array<i64: 1, 8, 32>}, {transform_indices = @transform_3, window_bounds = array<i64: 1, 1, 8, 8>}, {transform_indices = @transform_4, window_bounds = array<i64: 1, 8, 32>}]} {
    %c0 = arith.constant 0 : index
    %c0_0 = arith.constant 0 : index
    %c0_1 = arith.constant 0 : index
    %0 = vector.load %arg1[%c0, %c0_0, %c0_1] : memref<1x8x32xf32, #tpu.memory_space<vmem>>, vector<1x8x32xf32>
    %1 = vector.shape_cast %0 : vector<1x8x32xf32> to vector<8x32xf32>
    %c0_2 = arith.constant 0 : index
    %c0_3 = arith.constant 0 : index
    %c0_4 = arith.constant 0 : index
    %2 = vector.load %arg2[%c0_2, %c0_3, %c0_4] : memref<1x8x32xf32, #tpu.memory_space<vmem>>, vector<1x8x32xf32>
    %3 = vector.shape_cast %2 : vector<1x8x32xf32> to vector<8x32xf32>
    %c0_5 = arith.constant 0 : index
    %c0_6 = arith.constant 0 : index
    %c0_7 = arith.constant 0 : index
    %4 = vector.load %arg3[%c0_5, %c0_6, %c0_7] : memref<1x8x32xf32, #tpu.memory_space<vmem>>, vector<1x8x32xf32>
    %5 = vector.shape_cast %4 : vector<1x8x32xf32> to vector<8x32xf32>
    %c0_8 = arith.constant 0 : index
    %c0_9 = arith.constant 0 : index
    %c0_10 = arith.constant 0 : index
    %c0_11 = arith.constant 0 : index
    %6 = vector.load %arg4[%c0_8, %c0_9, %c0_10, %c0_11] : memref<1x1x8x8xf32, #tpu.memory_space<vmem>>, vector<1x1x8x8xf32>
    %7 = vector.shape_cast %6 : vector<1x1x8x8xf32> to vector<8x8xf32>
    %8 = vector.extract_strided_slice %1 {offsets = [0, 0], sizes = [8, 8], strides = [1, 1]} : vector<8x32xf32> to vector<8x8xf32>
    %9 = vector.extract_strided_slice %3 {offsets = [0, 0], sizes = [8, 8], strides = [1, 1]} : vector<8x32xf32> to vector<8x8xf32>
    %10 = vector.extract_strided_slice %5 {offsets = [0, 0], sizes = [8, 8], strides = [1, 1]} : vector<8x32xf32> to vector<8x8xf32>
    %cst = arith.constant dense<0.000000e+00> : vector<8x8xf32>
    %11 = tpu.matmul %8, %9, %cst {dimension_numbers = #tpu.dot_dimension_numbers<[1], [1], [0], [0], [0, 0, 1, 0], [], []>} : vector<8x8xf32>, vector<8x8xf32>, vector<8x8xf32> -> vector<8x8xf32>
    %cst_12 = arith.constant 0.353553385 : f32
    %12 = vector.broadcast %cst_12 : f32 to vector<8x8xf32>
    %13 = arith.mulf %11, %12 : vector<8x8xf32>
    %cst_13 = arith.constant 0.000000e+00 : f32
    %14 = vector.broadcast %cst_13 : f32 to vector<8x8xf32>
    %15 = arith.cmpf oeq, %7, %14 : vector<8x8xf32>
    %cst_14 = arith.constant -1.000000e+09 : f32
    %16 = vector.broadcast %cst_14 : f32 to vector<8x8xf32>
    %17 = arith.select %15, %16, %13 : vector<8x8xi1>, vector<8x8xf32>
    %cst_15 = arith.constant dense<0xFF800000> : vector<8xf32>
    %18 = vector.multi_reduction <maximumf>, %17, %cst_15 [1] : vector<8x8xf32> to vector<8xf32>
    %19 = vector.shape_cast %18 : vector<8xf32> to vector<8x1xf32>
    %20 = vector.broadcast %19 : vector<8x1xf32> to vector<8x8xf32>
    %21 = arith.subf %17, %20 : vector<8x8xf32>
    %22 = math.exp %21 : vector<8x8xf32>
    %cst_16 = arith.constant dense<0.000000e+00> : vector<8xf32>
    %23 = vector.multi_reduction <add>, %22, %cst_16 [1] : vector<8x8xf32> to vector<8xf32>
    %24 = vector.shape_cast %23 : vector<8xf32> to vector<8x1xf32>
    %25 = tpu.reciprocal %24 {approx = true} : vector<8x1xf32> -> vector<8x1xf32>
    %26 = vector.broadcast %25 : vector<8x1xf32> to vector<8x8xf32>
    %27 = arith.mulf %22, %26 : vector<8x8xf32>
    %cst_17 = arith.constant dense<0.000000e+00> : vector<8x8xf32>
    %28 = tpu.matmul %27, %10, %cst_17 {dimension_numbers = #tpu.dot_dimension_numbers<[1], [0], [0], [1], [0, 0, 1, 1], [], []>} : vector<8x8xf32>, vector<8x8xf32>, vector<8x8xf32> -> vector<8x8xf32>
    %c0_18 = arith.constant 0 : index
    %c0_19 = arith.constant 0 : index
    %c0_20 = arith.constant 0 : index
    %29 = vector.load %arg5[%c0_18, %c0_19, %c0_20] : memref<1x8x32xf32, #tpu.memory_space<vmem>>, vector<1x8x8xf32>
    %30 = vector.shape_cast %29 : vector<1x8x8xf32> to vector<8x8xf32>
    %31 = vector.shape_cast %28 : vector<8x8xf32> to vector<1x8x8xf32>
    tpu.vector_store %arg5[%c0_18, %c0_19, %c0_20], %31 {strides = array<i32>} : memref<1x8x32xf32, #tpu.memory_space<vmem>>, vector<1x8x8xf32>,
    %32 = vector.extract_strided_slice %1 {offsets = [0, 8], sizes = [8, 8], strides = [1, 1]} : vector<8x32xf32> to vector<8x8xf32>
    %33 = vector.extract_strided_slice %3 {offsets = [0, 8], sizes = [8, 8], strides = [1, 1]} : vector<8x32xf32> to vector<8x8xf32>
    %34 = vector.extract_strided_slice %5 {offsets = [0, 8], sizes = [8, 8], strides = [1, 1]} : vector<8x32xf32> to vector<8x8xf32>
    %cst_21 = arith.constant dense<0.000000e+00> : vector<8x8xf32>
    %35 = tpu.matmul %32, %33, %cst_21 {dimension_numbers = #tpu.dot_dimension_numbers<[1], [1], [0], [0], [0, 0, 1, 0], [], []>} : vector<8x8xf32>, vector<8x8xf32>, vector<8x8xf32> -> vector<8x8xf32>
    %cst_22 = arith.constant 0.353553385 : f32
    %36 = vector.broadcast %cst_22 : f32 to vector<8x8xf32>
    %37 = arith.mulf %35, %36 : vector<8x8xf32>
    %cst_23 = arith.constant 0.000000e+00 : f32
    %38 = vector.broadcast %cst_23 : f32 to vector<8x8xf32>
    %39 = arith.cmpf oeq, %7, %38 : vector<8x8xf32>
    %cst_24 = arith.constant -1.000000e+09 : f32
    %40 = vector.broadcast %cst_24 : f32 to vector<8x8xf32>
    %41 = arith.select %39, %40, %37 : vector<8x8xi1>, vector<8x8xf32>
    %cst_25 = arith.constant dense<0xFF800000> : vector<8xf32>
    %42 = vector.multi_reduction <maximumf>, %41, %cst_25 [1] : vector<8x8xf32> to vector<8xf32>
    %43 = vector.shape_cast %42 : vector<8xf32> to vector<8x1xf32>
    %44 = vector.broadcast %43 : vector<8x1xf32> to vector<8x8xf32>
    %45 = arith.subf %41, %44 : vector<8x8xf32>
    %46 = math.exp %45 : vector<8x8xf32>
    %cst_26 = arith.constant dense<0.000000e+00> : vector<8xf32>
    %47 = vector.multi_reduction <add>, %46, %cst_26 [1] : vector<8x8xf32> to vector<8xf32>
    %48 = vector.shape_cast %47 : vector<8xf32> to vector<8x1xf32>
    %49 = tpu.reciprocal %48 {approx = true} : vector<8x1xf32> -> vector<8x1xf32>
    %50 = vector.broadcast %49 : vector<8x1xf32> to vector<8x8xf32>
    %51 = arith.mulf %46, %50 : vector<8x8xf32>
    %cst_27 = arith.constant dense<0.000000e+00> : vector<8x8xf32>
    %52 = tpu.matmul %51, %34, %cst_27 {dimension_numbers = #tpu.dot_dimension_numbers<[1], [0], [0], [1], [0, 0, 1, 1], [], []>} : vector<8x8xf32>, vector<8x8xf32>, vector<8x8xf32> -> vector<8x8xf32>
    %c0_28 = arith.constant 0 : index
    %c0_29 = arith.constant 0 : index
    %c8 = arith.constant 8 : index
    %53 = vector.load %arg5[%c0_28, %c0_29, %c8] : memref<1x8x32xf32, #tpu.memory_space<vmem>>, vector<1x8x8xf32>
    %54 = vector.shape_cast %53 : vector<1x8x8xf32> to vector<8x8xf32>
    %55 = vector.shape_cast %52 : vector<8x8xf32> to vector<1x8x8xf32>
    tpu.vector_store %arg5[%c0_28, %c0_29, %c8], %55 {strides = array<i32>} : memref<1x8x32xf32, #tpu.memory_space<vmem>>, vector<1x8x8xf32>,
    %56 = vector.extract_strided_slice %1 {offsets = [0, 16], sizes = [8, 8], strides = [1, 1]} : vector<8x32xf32> to vector<8x8xf32>
    %57 = vector.extract_strided_slice %3 {offsets = [0, 16], sizes = [8, 8], strides = [1, 1]} : vector<8x32xf32> to vector<8x8xf32>
    %58 = vector.extract_strided_slice %5 {offsets = [0, 16], sizes = [8, 8], strides = [1, 1]} : vector<8x32xf32> to vector<8x8xf32>
    %cst_30 = arith.constant dense<0.000000e+00> : vector<8x8xf32>
    %59 = tpu.matmul %56, %57, %cst_30 {dimension_numbers = #tpu.dot_dimension_numbers<[1], [1], [0], [0], [0, 0, 1, 0], [], []>} : vector<8x8xf32>, vector<8x8xf32>, vector<8x8xf32> -> vector<8x8xf32>
    %cst_31 = arith.constant 0.353553385 : f32
    %60 = vector.broadcast %cst_31 : f32 to vector<8x8xf32>
    %61 = arith.mulf %59, %60 : vector<8x8xf32>
    %cst_32 = arith.constant 0.000000e+00 : f32
    %62 = vector.broadcast %cst_32 : f32 to vector<8x8xf32>
    %63 = arith.cmpf oeq, %7, %62 : vector<8x8xf32>
    %cst_33 = arith.constant -1.000000e+09 : f32
    %64 = vector.broadcast %cst_33 : f32 to vector<8x8xf32>
    %65 = arith.select %63, %64, %61 : vector<8x8xi1>, vector<8x8xf32>
    %cst_34 = arith.constant dense<0xFF800000> : vector<8xf32>
    %66 = vector.multi_reduction <maximumf>, %65, %cst_34 [1] : vector<8x8xf32> to vector<8xf32>
    %67 = vector.shape_cast %66 : vector<8xf32> to vector<8x1xf32>
    %68 = vector.broadcast %67 : vector<8x1xf32> to vector<8x8xf32>
    %69 = arith.subf %65, %68 : vector<8x8xf32>
    %70 = math.exp %69 : vector<8x8xf32>
    %cst_35 = arith.constant dense<0.000000e+00> : vector<8xf32>
    %71 = vector.multi_reduction <add>, %70, %cst_35 [1] : vector<8x8xf32> to vector<8xf32>
    %72 = vector.shape_cast %71 : vector<8xf32> to vector<8x1xf32>
    %73 = tpu.reciprocal %72 {approx = true} : vector<8x1xf32> -> vector<8x1xf32>
    %74 = vector.broadcast %73 : vector<8x1xf32> to vector<8x8xf32>
    %75 = arith.mulf %70, %74 : vector<8x8xf32>
    %cst_36 = arith.constant dense<0.000000e+00> : vector<8x8xf32>
    %76 = tpu.matmul %75, %58, %cst_36 {dimension_numbers = #tpu.dot_dimension_numbers<[1], [0], [0], [1], [0, 0, 1, 1], [], []>} : vector<8x8xf32>, vector<8x8xf32>, vector<8x8xf32> -> vector<8x8xf32>
    %c0_37 = arith.constant 0 : index
    %c0_38 = arith.constant 0 : index
    %c16 = arith.constant 16 : index
    %77 = vector.load %arg5[%c0_37, %c0_38, %c16] : memref<1x8x32xf32, #tpu.memory_space<vmem>>, vector<1x8x8xf32>
    %78 = vector.shape_cast %77 : vector<1x8x8xf32> to vector<8x8xf32>
    %79 = vector.shape_cast %76 : vector<8x8xf32> to vector<1x8x8xf32>
    tpu.vector_store %arg5[%c0_37, %c0_38, %c16], %79 {strides = array<i32>} : memref<1x8x32xf32, #tpu.memory_space<vmem>>, vector<1x8x8xf32>,
    %80 = vector.extract_strided_slice %1 {offsets = [0, 24], sizes = [8, 8], strides = [1, 1]} : vector<8x32xf32> to vector<8x8xf32>
    %81 = vector.extract_strided_slice %3 {offsets = [0, 24], sizes = [8, 8], strides = [1, 1]} : vector<8x32xf32> to vector<8x8xf32>
    %82 = vector.extract_strided_slice %5 {offsets = [0, 24], sizes = [8, 8], strides = [1, 1]} : vector<8x32xf32> to vector<8x8xf32>
    %cst_39 = arith.constant dense<0.000000e+00> : vector<8x8xf32>
    %83 = tpu.matmul %80, %81, %cst_39 {dimension_numbers = #tpu.dot_dimension_numbers<[1], [1], [0], [0], [0, 0, 1, 0], [], []>} : vector<8x8xf32>, vector<8x8xf32>, vector<8x8xf32> -> vector<8x8xf32>
    %cst_40 = arith.constant 0.353553385 : f32
    %84 = vector.broadcast %cst_40 : f32 to vector<8x8xf32>
    %85 = arith.mulf %83, %84 : vector<8x8xf32>
    %cst_41 = arith.constant 0.000000e+00 : f32
    %86 = vector.broadcast %cst_41 : f32 to vector<8x8xf32>
    %87 = arith.cmpf oeq, %7, %86 : vector<8x8xf32>
    %cst_42 = arith.constant -1.000000e+09 : f32
    %88 = vector.broadcast %cst_42 : f32 to vector<8x8xf32>
    %89 = arith.select %87, %88, %85 : vector<8x8xi1>, vector<8x8xf32>
    %cst_43 = arith.constant dense<0xFF800000> : vector<8xf32>
    %90 = vector.multi_reduction <maximumf>, %89, %cst_43 [1] : vector<8x8xf32> to vector<8xf32>
    %91 = vector.shape_cast %90 : vector<8xf32> to vector<8x1xf32>
    %92 = vector.broadcast %91 : vector<8x1xf32> to vector<8x8xf32>
    %93 = arith.subf %89, %92 : vector<8x8xf32>
    %94 = math.exp %93 : vector<8x8xf32>
    %cst_44 = arith.constant dense<0.000000e+00> : vector<8xf32>
    %95 = vector.multi_reduction <add>, %94, %cst_44 [1] : vector<8x8xf32> to vector<8xf32>
    %96 = vector.shape_cast %95 : vector<8xf32> to vector<8x1xf32>
    %97 = tpu.reciprocal %96 {approx = true} : vector<8x1xf32> -> vector<8x1xf32>
    %98 = vector.broadcast %97 : vector<8x1xf32> to vector<8x8xf32>
    %99 = arith.mulf %94, %98 : vector<8x8xf32>
    %cst_45 = arith.constant dense<0.000000e+00> : vector<8x8xf32>
    %100 = tpu.matmul %99, %82, %cst_45 {dimension_numbers = #tpu.dot_dimension_numbers<[1], [0], [0], [1], [0, 0, 1, 1], [], []>} : vector<8x8xf32>, vector<8x8xf32>, vector<8x8xf32> -> vector<8x8xf32>
    %c0_46 = arith.constant 0 : index
    %c0_47 = arith.constant 0 : index
    %c24 = arith.constant 24 : index
    %101 = vector.load %arg5[%c0_46, %c0_47, %c24] : memref<1x8x32xf32, #tpu.memory_space<vmem>>, vector<1x8x8xf32>
    %102 = vector.shape_cast %101 : vector<1x8x8xf32> to vector<8x8xf32>
    %103 = vector.shape_cast %100 : vector<8x8xf32> to vector<1x8x8xf32>
    tpu.vector_store %arg5[%c0_46, %c0_47, %c24], %103 {strides = array<i32>} : memref<1x8x32xf32, #tpu.memory_space<vmem>>, vector<1x8x8xf32>,
    return
  }
  func.func @transform_0(%arg0: i32) -> (i32, i32, i32) {
    %c0_i32 = arith.constant 0 : i32
    %c0_i32_0 = arith.constant 0 : i32
    %c0_i32_1 = arith.constant 0 : i32
    return %arg0, %c0_i32, %c0_i32_0 : i32, i32, i32
  }
  func.func @transform_1(%arg0: i32) -> (i32, i32, i32) {
    %c0_i32 = arith.constant 0 : i32
    %c0_i32_0 = arith.constant 0 : i32
    %c0_i32_1 = arith.constant 0 : i32
    return %arg0, %c0_i32, %c0_i32_0 : i32, i32, i32
  }
  func.func @transform_2(%arg0: i32) -> (i32, i32, i32) {
    %c0_i32 = arith.constant 0 : i32
    %c0_i32_0 = arith.constant 0 : i32
    %c0_i32_1 = arith.constant 0 : i32
    return %arg0, %c0_i32, %c0_i32_0 : i32, i32, i32
  }
  func.func @transform_3(%arg0: i32) -> (i32, i32, i32, i32) {
    %c0_i32 = arith.constant 0 : i32
    %c0_i32_0 = arith.constant 0 : i32
    %c0_i32_1 = arith.constant 0 : i32
    %c0_i32_2 = arith.constant 0 : i32
    return %arg0, %c0_i32, %c0_i32_0, %c0_i32_1 : i32, i32, i32, i32
  }
  func.func @transform_4(%arg0: i32) -> (i32, i32, i32) {
    %c0_i32 = arith.constant 0 : i32
    %c0_i32_0 = arith.constant 0 : i32
    %c0_i32_1 = arith.constant 0 : i32
    return %arg0, %c0_i32, %c0_i32_0 : i32, i32, i32
  }
}

module attributes {stable_mosaic.version = 11 : i64} {
  func.func @_proj_addnorm_kernel(%arg0: i32, %arg1: memref<16x32xf32, #tpu.memory_space<vmem>>, %arg2: memref<32x32xf32, #tpu.memory_space<vmem>>, %arg3: memref<1x32xf32, #tpu.memory_space<vmem>>, %arg4: memref<16x32xf32, #tpu.memory_space<vmem>>, %arg5: memref<1x32xf32, #tpu.memory_space<vmem>>, %arg6: memref<16x32xf32, #tpu.memory_space<vmem>>) attributes {dimension_semantics = [#tpu.dimension_semantics<parallel>], iteration_bounds = array<i64: 1>, scalar_prefetch = 0 : i64, scratch_operands = 0 : i64, tpu.core_type = #tpu.core_type<tc>, window_params = [{transform_indices = @transform_0, window_bounds = array<i64: 16, 32>}, {pipeline_mode = #tpu.pipeline_mode<synchronous>, transform_indices = @transform_1, window_bounds = array<i64: 32, 32>}, {pipeline_mode = #tpu.pipeline_mode<synchronous>, transform_indices = @transform_2, window_bounds = array<i64: 1, 32>}, {transform_indices = @transform_3, window_bounds = array<i64: 16, 32>}, {pipeline_mode = #tpu.pipeline_mode<synchronous>, transform_indices = @transform_4, window_bounds = array<i64: 1, 32>}, {transform_indices = @transform_5, window_bounds = array<i64: 16, 32>}]} {
    %c0 = arith.constant 0 : index
    %c0_0 = arith.constant 0 : index
    %0 = vector.load %arg1[%c0, %c0_0] : memref<16x32xf32, #tpu.memory_space<vmem>>, vector<16x32xf32>
    %c0_1 = arith.constant 0 : index
    %c0_2 = arith.constant 0 : index
    %1 = vector.load %arg2[%c0_1, %c0_2] : memref<32x32xf32, #tpu.memory_space<vmem>>, vector<32x32xf32>
    %cst = arith.constant dense<0.000000e+00> : vector<16x32xf32>
    %2 = tpu.matmul %0, %1, %cst {dimension_numbers = #tpu.dot_dimension_numbers<[1], [0], [0], [1], [0, 0, 1, 1], [], []>} : vector<16x32xf32>, vector<32x32xf32>, vector<16x32xf32> -> vector<16x32xf32>
    %c0_3 = arith.constant 0 : index
    %c0_4 = arith.constant 0 : index
    %3 = vector.load %arg3[%c0_3, %c0_4] : memref<1x32xf32, #tpu.memory_space<vmem>>, vector<1x32xf32>
    %4 = vector.broadcast %3 : vector<1x32xf32> to vector<16x32xf32>
    %5 = arith.addf %2, %4 : vector<16x32xf32>
    %c0_5 = arith.constant 0 : index
    %c0_6 = arith.constant 0 : index
    %6 = vector.load %arg4[%c0_5, %c0_6] : memref<16x32xf32, #tpu.memory_space<vmem>>, vector<16x32xf32>
    %7 = arith.addf %5, %6 : vector<16x32xf32>
    %8 = arith.mulf %7, %7 : vector<16x32xf32>
    %cst_7 = arith.constant dense<0.000000e+00> : vector<16xf32>
    %9 = vector.multi_reduction <add>, %8, %cst_7 [1] : vector<16x32xf32> to vector<16xf32>
    %10 = vector.shape_cast %9 : vector<16xf32> to vector<16x1xf32>
    %cst_8 = arith.constant 3.200000e+01 : f32
    %11 = vector.broadcast %cst_8 : f32 to vector<16x1xf32>
    %12 = arith.divf %10, %11 : vector<16x1xf32>
    %cst_9 = arith.constant 9.99999974E-6 : f32
    %13 = vector.broadcast %cst_9 : f32 to vector<16x1xf32>
    %14 = arith.addf %12, %13 : vector<16x1xf32>
    %15 = math.rsqrt %14 : vector<16x1xf32>
    %16 = vector.broadcast %15 : vector<16x1xf32> to vector<16x32xf32>
    %17 = arith.mulf %7, %16 : vector<16x32xf32>
    %c0_10 = arith.constant 0 : index
    %c0_11 = arith.constant 0 : index
    %18 = vector.load %arg5[%c0_10, %c0_11] : memref<1x32xf32, #tpu.memory_space<vmem>>, vector<1x32xf32>
    %19 = vector.broadcast %18 : vector<1x32xf32> to vector<16x32xf32>
    %20 = arith.mulf %17, %19 : vector<16x32xf32>
    %c0_12 = arith.constant 0 : index
    %c0_13 = arith.constant 0 : index
    %21 = vector.load %arg6[%c0_12, %c0_13] : memref<16x32xf32, #tpu.memory_space<vmem>>, vector<16x32xf32>
    tpu.vector_store %arg6[%c0_12, %c0_13], %20 {strides = array<i32>} : memref<16x32xf32, #tpu.memory_space<vmem>>, vector<16x32xf32>,
    return
  }
  func.func @transform_0(%arg0: i32) -> (i32, i32) {
    %c0_i32 = arith.constant 0 : i32
    %c0_i32_0 = arith.constant 0 : i32
    return %arg0, %c0_i32 : i32, i32
  }
  func.func @transform_1(%arg0: i32) -> (i32, i32) {
    %c0_i32 = arith.constant 0 : i32
    %c0_i32_0 = arith.constant 0 : i32
    %c0_i32_1 = arith.constant 0 : i32
    return %c0_i32, %c0_i32_0 : i32, i32
  }
  func.func @transform_2(%arg0: i32) -> (i32, i32) {
    %c0_i32 = arith.constant 0 : i32
    %c0_i32_0 = arith.constant 0 : i32
    %c0_i32_1 = arith.constant 0 : i32
    return %c0_i32, %c0_i32_0 : i32, i32
  }
  func.func @transform_3(%arg0: i32) -> (i32, i32) {
    %c0_i32 = arith.constant 0 : i32
    %c0_i32_0 = arith.constant 0 : i32
    return %arg0, %c0_i32 : i32, i32
  }
  func.func @transform_4(%arg0: i32) -> (i32, i32) {
    %c0_i32 = arith.constant 0 : i32
    %c0_i32_0 = arith.constant 0 : i32
    %c0_i32_1 = arith.constant 0 : i32
    return %c0_i32, %c0_i32_0 : i32, i32
  }
  func.func @transform_5(%arg0: i32) -> (i32, i32) {
    %c0_i32 = arith.constant 0 : i32
    %c0_i32_0 = arith.constant 0 : i32
    return %arg0, %c0_i32 : i32, i32
  }
}

module attributes {stable_mosaic.version = 11 : i64} {
  func.func @_fused_proj_kernel(%arg0: i32, %arg1: memref<16x32xf32, #tpu.memory_space<vmem>>, %arg2: memref<32x96xf32, #tpu.memory_space<vmem>>, %arg3: memref<1x96xf32, #tpu.memory_space<vmem>>, %arg4: memref<16x32xf32, #tpu.memory_space<vmem>>, %arg5: memref<16x32xf32, #tpu.memory_space<vmem>>, %arg6: memref<16x32xf32, #tpu.memory_space<vmem>>) attributes {dimension_semantics = [#tpu.dimension_semantics<parallel>], iteration_bounds = array<i64: 1>, scalar_prefetch = 0 : i64, scratch_operands = 0 : i64, tpu.core_type = #tpu.core_type<tc>, window_params = [{transform_indices = @transform_0, window_bounds = array<i64: 16, 32>}, {pipeline_mode = #tpu.pipeline_mode<synchronous>, transform_indices = @transform_1, window_bounds = array<i64: 32, 96>}, {pipeline_mode = #tpu.pipeline_mode<synchronous>, transform_indices = @transform_2, window_bounds = array<i64: 1, 96>}, {transform_indices = @transform_3, window_bounds = array<i64: 16, 32>}, {transform_indices = @transform_4, window_bounds = array<i64: 16, 32>}, {transform_indices = @transform_5, window_bounds = array<i64: 16, 32>}]} {
    %c0 = arith.constant 0 : index
    %c0_0 = arith.constant 0 : index
    %0 = vector.load %arg1[%c0, %c0_0] : memref<16x32xf32, #tpu.memory_space<vmem>>, vector<16x32xf32>
    %c0_1 = arith.constant 0 : index
    %c0_2 = arith.constant 0 : index
    %1 = vector.load %arg2[%c0_1, %c0_2] : memref<32x96xf32, #tpu.memory_space<vmem>>, vector<32x96xf32>
    %cst = arith.constant dense<0.000000e+00> : vector<16x96xf32>
    %2 = tpu.matmul %0, %1, %cst {dimension_numbers = #tpu.dot_dimension_numbers<[1], [0], [0], [1], [0, 0, 1, 1], [], []>} : vector<16x32xf32>, vector<32x96xf32>, vector<16x96xf32> -> vector<16x96xf32>
    %c0_3 = arith.constant 0 : index
    %c0_4 = arith.constant 0 : index
    %3 = vector.load %arg3[%c0_3, %c0_4] : memref<1x96xf32, #tpu.memory_space<vmem>>, vector<1x96xf32>
    %4 = vector.broadcast %3 : vector<1x96xf32> to vector<16x96xf32>
    %5 = arith.addf %2, %4 : vector<16x96xf32>
    %6 = vector.extract_strided_slice %5 {offsets = [0, 0], sizes = [16, 32], strides = [1, 1]} : vector<16x96xf32> to vector<16x32xf32>
    %c0_5 = arith.constant 0 : index
    %c0_6 = arith.constant 0 : index
    %7 = vector.load %arg4[%c0_5, %c0_6] : memref<16x32xf32, #tpu.memory_space<vmem>>, vector<16x32xf32>
    tpu.vector_store %arg4[%c0_5, %c0_6], %6 {strides = array<i32>} : memref<16x32xf32, #tpu.memory_space<vmem>>, vector<16x32xf32>,
    %8 = vector.extract_strided_slice %5 {offsets = [0, 32], sizes = [16, 32], strides = [1, 1]} : vector<16x96xf32> to vector<16x32xf32>
    %c0_7 = arith.constant 0 : index
    %c0_8 = arith.constant 0 : index
    %9 = vector.load %arg5[%c0_7, %c0_8] : memref<16x32xf32, #tpu.memory_space<vmem>>, vector<16x32xf32>
    tpu.vector_store %arg5[%c0_7, %c0_8], %8 {strides = array<i32>} : memref<16x32xf32, #tpu.memory_space<vmem>>, vector<16x32xf32>,
    %10 = vector.extract_strided_slice %5 {offsets = [0, 64], sizes = [16, 32], strides = [1, 1]} : vector<16x96xf32> to vector<16x32xf32>
    %c0_9 = arith.constant 0 : index
    %c0_10 = arith.constant 0 : index
    %11 = vector.load %arg6[%c0_9, %c0_10] : memref<16x32xf32, #tpu.memory_space<vmem>>, vector<16x32xf32>
    tpu.vector_store %arg6[%c0_9, %c0_10], %10 {strides = array<i32>} : memref<16x32xf32, #tpu.memory_space<vmem>>, vector<16x32xf32>,
    return
  }
  func.func @transform_0(%arg0: i32) -> (i32, i32) {
    %c0_i32 = arith.constant 0 : i32
    %c0_i32_0 = arith.constant 0 : i32
    return %arg0, %c0_i32 : i32, i32
  }
  func.func @transform_1(%arg0: i32) -> (i32, i32) {
    %c0_i32 = arith.constant 0 : i32
    %c0_i32_0 = arith.constant 0 : i32
    %c0_i32_1 = arith.constant 0 : i32
    return %c0_i32, %c0_i32_0 : i32, i32
  }
  func.func @transform_2(%arg0: i32) -> (i32, i32) {
    %c0_i32 = arith.constant 0 : i32
    %c0_i32_0 = arith.constant 0 : i32
    %c0_i32_1 = arith.constant 0 : i32
    return %c0_i32, %c0_i32_0 : i32, i32
  }
  func.func @transform_3(%arg0: i32) -> (i32, i32) {
    %c0_i32 = arith.constant 0 : i32
    %c0_i32_0 = arith.constant 0 : i32
    return %arg0, %c0_i32 : i32, i32
  }
  func.func @transform_4(%arg0: i32) -> (i32, i32) {
    %c0_i32 = arith.constant 0 : i32
    %c0_i32_0 = arith.constant 0 : i32
    return %arg0, %c0_i32 : i32, i32
  }
  func.func @transform_5(%arg0: i32) -> (i32, i32) {
    %c0_i32 = arith.constant 0 : i32
    %c0_i32_0 = arith.constant 0 : i32
    return %arg0, %c0_i32 : i32, i32
  }
}

module attributes {stable_mosaic.version = 11 : i64} {
  func.func @_fused_proj_kernel(%arg0: i32, %arg1: memref<16x32xf32, #tpu.memory_space<vmem>>, %arg2: memref<32x32xf32, #tpu.memory_space<vmem>>, %arg3: memref<1x32xf32, #tpu.memory_space<vmem>>, %arg4: memref<16x32xf32, #tpu.memory_space<vmem>>) attributes {dimension_semantics = [#tpu.dimension_semantics<parallel>], iteration_bounds = array<i64: 1>, scalar_prefetch = 0 : i64, scratch_operands = 0 : i64, tpu.core_type = #tpu.core_type<tc>, window_params = [{transform_indices = @transform_0, window_bounds = array<i64: 16, 32>}, {pipeline_mode = #tpu.pipeline_mode<synchronous>, transform_indices = @transform_1, window_bounds = array<i64: 32, 32>}, {pipeline_mode = #tpu.pipeline_mode<synchronous>, transform_indices = @transform_2, window_bounds = array<i64: 1, 32>}, {transform_indices = @transform_3, window_bounds = array<i64: 16, 32>}]} {
    %c0 = arith.constant 0 : index
    %c0_0 = arith.constant 0 : index
    %0 = vector.load %arg1[%c0, %c0_0] : memref<16x32xf32, #tpu.memory_space<vmem>>, vector<16x32xf32>
    %c0_1 = arith.constant 0 : index
    %c0_2 = arith.constant 0 : index
    %1 = vector.load %arg2[%c0_1, %c0_2] : memref<32x32xf32, #tpu.memory_space<vmem>>, vector<32x32xf32>
    %cst = arith.constant dense<0.000000e+00> : vector<16x32xf32>
    %2 = tpu.matmul %0, %1, %cst {dimension_numbers = #tpu.dot_dimension_numbers<[1], [0], [0], [1], [0, 0, 1, 1], [], []>} : vector<16x32xf32>, vector<32x32xf32>, vector<16x32xf32> -> vector<16x32xf32>
    %c0_3 = arith.constant 0 : index
    %c0_4 = arith.constant 0 : index
    %3 = vector.load %arg3[%c0_3, %c0_4] : memref<1x32xf32, #tpu.memory_space<vmem>>, vector<1x32xf32>
    %4 = vector.broadcast %3 : vector<1x32xf32> to vector<16x32xf32>
    %5 = arith.addf %2, %4 : vector<16x32xf32>
    %c0_5 = arith.constant 0 : index
    %c0_6 = arith.constant 0 : index
    %6 = vector.load %arg4[%c0_5, %c0_6] : memref<16x32xf32, #tpu.memory_space<vmem>>, vector<16x32xf32>
    tpu.vector_store %arg4[%c0_5, %c0_6], %5 {strides = array<i32>} : memref<16x32xf32, #tpu.memory_space<vmem>>, vector<16x32xf32>,
    return
  }
  func.func @transform_0(%arg0: i32) -> (i32, i32) {
    %c0_i32 = arith.constant 0 : i32
    %c0_i32_0 = arith.constant 0 : i32
    return %arg0, %c0_i32 : i32, i32
  }
  func.func @transform_1(%arg0: i32) -> (i32, i32) {
    %c0_i32 = arith.constant 0 : i32
    %c0_i32_0 = arith.constant 0 : i32
    %c0_i32_1 = arith.constant 0 : i32
    return %c0_i32, %c0_i32_0 : i32, i32
  }
  func.func @transform_2(%arg0: i32) -> (i32, i32) {
    %c0_i32 = arith.constant 0 : i32
    %c0_i32_0 = arith.constant 0 : i32
    %c0_i32_1 = arith.constant 0 : i32
    return %c0_i32, %c0_i32_0 : i32, i32
  }
  func.func @transform_3(%arg0: i32) -> (i32, i32) {
    %c0_i32 = arith.constant 0 : i32
    %c0_i32_0 = arith.constant 0 : i32
    return %arg0, %c0_i32 : i32, i32
  }
}

module attributes {stable_mosaic.version = 11 : i64} {
  func.func @_ffn_addnorm_kernel(%arg0: i32, %arg1: memref<16x32xf32, #tpu.memory_space<vmem>>, %arg2: memref<32x64xf32, #tpu.memory_space<vmem>>, %arg3: memref<1x64xf32, #tpu.memory_space<vmem>>, %arg4: memref<64x32xf32, #tpu.memory_space<vmem>>, %arg5: memref<1x32xf32, #tpu.memory_space<vmem>>, %arg6: memref<1x32xf32, #tpu.memory_space<vmem>>, %arg7: memref<16x32xf32, #tpu.memory_space<vmem>>) attributes {dimension_semantics = [#tpu.dimension_semantics<parallel>], iteration_bounds = array<i64: 1>, scalar_prefetch = 0 : i64, scratch_operands = 0 : i64, tpu.core_type = #tpu.core_type<tc>, window_params = [{transform_indices = @transform_0, window_bounds = array<i64: 16, 32>}, {pipeline_mode = #tpu.pipeline_mode<synchronous>, transform_indices = @transform_1, window_bounds = array<i64: 32, 64>}, {pipeline_mode = #tpu.pipeline_mode<synchronous>, transform_indices = @transform_2, window_bounds = array<i64: 1, 64>}, {pipeline_mode = #tpu.pipeline_mode<synchronous>, transform_indices = @transform_3, window_bounds = array<i64: 64, 32>}, {pipeline_mode = #tpu.pipeline_mode<synchronous>, transform_indices = @transform_4, window_bounds = array<i64: 1, 32>}, {pipeline_mode = #tpu.pipeline_mode<synchronous>, transform_indices = @transform_5, window_bounds = array<i64: 1, 32>}, {transform_indices = @transform_6, window_bounds = array<i64: 16, 32>}]} {
    %c0 = arith.constant 0 : index
    %c0_0 = arith.constant 0 : index
    %0 = vector.load %arg1[%c0, %c0_0] : memref<16x32xf32, #tpu.memory_space<vmem>>, vector<16x32xf32>
    %c0_1 = arith.constant 0 : index
    %c0_2 = arith.constant 0 : index
    %1 = vector.load %arg2[%c0_1, %c0_2] : memref<32x64xf32, #tpu.memory_space<vmem>>, vector<32x64xf32>
    %cst = arith.constant dense<0.000000e+00> : vector<16x64xf32>
    %2 = tpu.matmul %0, %1, %cst {dimension_numbers = #tpu.dot_dimension_numbers<[1], [0], [0], [1], [0, 0, 1, 1], [], []>} : vector<16x32xf32>, vector<32x64xf32>, vector<16x64xf32> -> vector<16x64xf32>
    %c0_3 = arith.constant 0 : index
    %c0_4 = arith.constant 0 : index
    %3 = vector.load %arg3[%c0_3, %c0_4] : memref<1x64xf32, #tpu.memory_space<vmem>>, vector<1x64xf32>
    %4 = vector.broadcast %3 : vector<1x64xf32> to vector<16x64xf32>
    %5 = arith.addf %2, %4 : vector<16x64xf32>
    %cst_5 = arith.constant 0.000000e+00 : f32
    %6 = vector.broadcast %cst_5 : f32 to vector<16x64xf32>
    %7 = arith.maximumf %5, %6 : vector<16x64xf32>
    %c0_6 = arith.constant 0 : index
    %c0_7 = arith.constant 0 : index
    %8 = vector.load %arg4[%c0_6, %c0_7] : memref<64x32xf32, #tpu.memory_space<vmem>>, vector<64x32xf32>
    %cst_8 = arith.constant dense<0.000000e+00> : vector<16x32xf32>
    %9 = tpu.matmul %7, %8, %cst_8 {dimension_numbers = #tpu.dot_dimension_numbers<[1], [0], [0], [1], [0, 0, 1, 1], [], []>} : vector<16x64xf32>, vector<64x32xf32>, vector<16x32xf32> -> vector<16x32xf32>
    %c0_9 = arith.constant 0 : index
    %c0_10 = arith.constant 0 : index
    %10 = vector.load %arg5[%c0_9, %c0_10] : memref<1x32xf32, #tpu.memory_space<vmem>>, vector<1x32xf32>
    %11 = vector.broadcast %10 : vector<1x32xf32> to vector<16x32xf32>
    %12 = arith.addf %9, %11 : vector<16x32xf32>
    %13 = arith.addf %12, %0 : vector<16x32xf32>
    %14 = arith.mulf %13, %13 : vector<16x32xf32>
    %cst_11 = arith.constant dense<0.000000e+00> : vector<16xf32>
    %15 = vector.multi_reduction <add>, %14, %cst_11 [1] : vector<16x32xf32> to vector<16xf32>
    %16 = vector.shape_cast %15 : vector<16xf32> to vector<16x1xf32>
    %cst_12 = arith.constant 3.200000e+01 : f32
    %17 = vector.broadcast %cst_12 : f32 to vector<16x1xf32>
    %18 = arith.divf %16, %17 : vector<16x1xf32>
    %cst_13 = arith.constant 9.99999974E-6 : f32
    %19 = vector.broadcast %cst_13 : f32 to vector<16x1xf32>
    %20 = arith.addf %18, %19 : vector<16x1xf32>
    %21 = math.rsqrt %20 : vector<16x1xf32>
    %22 = vector.broadcast %21 : vector<16x1xf32> to vector<16x32xf32>
    %23 = arith.mulf %13, %22 : vector<16x32xf32>
    %c0_14 = arith.constant 0 : index
    %c0_15 = arith.constant 0 : index
    %24 = vector.load %arg6[%c0_14, %c0_15] : memref<1x32xf32, #tpu.memory_space<vmem>>, vector<1x32xf32>
    %25 = vector.broadcast %24 : vector<1x32xf32> to vector<16x32xf32>
    %26 = arith.mulf %23, %25 : vector<16x32xf32>
    %c0_16 = arith.constant 0 : index
    %c0_17 = arith.constant 0 : index
    %27 = vector.load %arg7[%c0_16, %c0_17] : memref<16x32xf32, #tpu.memory_space<vmem>>, vector<16x32xf32>
    tpu.vector_store %arg7[%c0_16, %c0_17], %26 {strides = array<i32>} : memref<16x32xf32, #tpu.memory_space<vmem>>, vector<16x32xf32>,
    return
  }
  func.func @transform_0(%arg0: i32) -> (i32, i32) {
    %c0_i32 = arith.constant 0 : i32
    %c0_i32_0 = arith.constant 0 : i32
    return %arg0, %c0_i32 : i32, i32
  }
  func.func @transform_1(%arg0: i32) -> (i32, i32) {
    %c0_i32 = arith.constant 0 : i32
    %c0_i32_0 = arith.constant 0 : i32
    %c0_i32_1 = arith.constant 0 : i32
    return %c0_i32, %c0_i32_0 : i32, i32
  }
  func.func @transform_2(%arg0: i32) -> (i32, i32) {
    %c0_i32 = arith.constant 0 : i32
    %c0_i32_0 = arith.constant 0 : i32
    %c0_i32_1 = arith.constant 0 : i32
    return %c0_i32, %c0_i32_0 : i32, i32
  }
  func.func @transform_3(%arg0: i32) -> (i32, i32) {
    %c0_i32 = arith.constant 0 : i32
    %c0_i32_0 = arith.constant 0 : i32
    %c0_i32_1 = arith.constant 0 : i32
    return %c0_i32, %c0_i32_0 : i32, i32
  }
  func.func @transform_4(%arg0: i32) -> (i32, i32) {
    %c0_i32 = arith.constant 0 : i32
    %c0_i32_0 = arith.constant 0 : i32
    %c0_i32_1 = arith.constant 0 : i32
    return %c0_i32, %c0_i32_0 : i32, i32
  }
  func.func @transform_5(%arg0: i32) -> (i32, i32) {
    %c0_i32 = arith.constant 0 : i32
    %c0_i32_0 = arith.constant 0 : i32
    %c0_i32_1 = arith.constant 0 : i32
    return %c0_i32, %c0_i32_0 : i32, i32
  }
  func.func @transform_6(%arg0: i32) -> (i32, i32) {
    %c0_i32 = arith.constant 0 : i32
    %c0_i32_0 = arith.constant 0 : i32
    return %arg0, %c0_i32 : i32, i32
  }
}

</mosaic_0001>

<llo_original>
// kernel: decoder_layer.10
$region0: #{decoder_layer.10}
  #allocation0 [shape = 'u32[]', space=smem, size = 0x4, offset = 0x4, fixed_abs, tag = 'smem constant byte address 0x4 - core index']
  #allocation1 [shape = 'u32[144,128]{1,0:T(1,128)}', space=vmem, size = 0x12000, scoped, tag = 'internal scratch']
  %s0 = inlined_call_operand.vmem [shape: f32[16,32], index: 0, kind: input, shape index: {}]
  %s1 = inlined_call_operand.vmem [shape: f32[32,32], index: 1, kind: input, shape index: {}]
  %s2 = inlined_call_operand.vmem [shape: f32[1,32], index: 2, kind: input, shape index: {}]
  %s3 = inlined_call_operand.vmem [shape: f32[16,32], index: 3, kind: input, shape index: {}]
  %s4 = inlined_call_operand.vmem [shape: f32[1,32], index: 4, kind: input, shape index: {}]
  %s5 = inlined_call_operand.vmem [shape: f32[16,32], index: 5, kind: output, shape index: {}]
  %s6 = sld [smem:[#allocation0]]
  $region30: #{decoder_layer.10} parent=0
    _
  %s8 = ssub.s32 1, %s6
  %s9 = scalar_select 0, %s8, %s6
  // Predicated region
  $region2: #{decoder_layer.10} parent=0 // pred_check
    _
  $region3: #{decoder_layer.10} parent=0 // pred_check_branch
    %11 = sbr.rel (0) target = $region5
  $region4: #{decoder_layer.10} parent=0 // pred_region
    _
  $region5: #{decoder_layer.10} parent=0 // pred_fallthru
    _
  // Predicated region
  $region6: #{decoder_layer.10} parent=0 // pred_check
    _
  $region7: #{decoder_layer.10} parent=0 // pred_check_branch
    %13 = sbr.rel (0) target = $region9
  $region8: #{decoder_layer.10} parent=0 // pred_region
    _
  $region9: #{decoder_layer.10} parent=0 // pred_fallthru
    _
  // Predicated region
  $region10: #{decoder_layer.10} parent=0 // pred_check
    _
  $region11: #{decoder_layer.10} parent=0 // pred_check_branch
    %15 = sbr.rel (0) target = $region13
  $region12: #{decoder_layer.10} parent=0 // pred_region
    _
  $region13: #{decoder_layer.10} parent=0 // pred_fallthru
    _
  // Predicated region
  $region14: #{decoder_layer.10} parent=0 // pred_check
    _
  $region15: #{decoder_layer.10} parent=0 // pred_check_branch
    %17 = sbr.rel (0) target = $region17
  $region16: #{decoder_layer.10} parent=0 // pred_region
    _
  $region17: #{decoder_layer.10} parent=0 // pred_fallthru
    _
  // Predicated region
  $region18: #{decoder_layer.10} parent=0 // pred_check
    _
  $region19: #{decoder_layer.10} parent=0 // pred_check_branch
    %19 = sbr.rel (0) target = $region21
  $region20: #{decoder_layer.10} parent=0 // pred_region
    _
  $region21: #{decoder_layer.10} parent=0 // pred_fallthru
    _
  %v20 = vld [vmem:[%s0] sm:$0xff]
  %v21 = vld [vmem:[%s0 + $0x8] sm:$0xff]
  %v22 = vld [vmem:[%s1] sm:$0xff]
  %v23 = vld [vmem:[%s1 + $0x8] sm:$0xff]
  %v24 = vld [vmem:[%s1 + $0x10] sm:$0xff]
  %v25 = vld [vmem:[%s1 + $0x18] sm:$0xff]
  %v26 = vld [vmem:[%s2] sm:$0x1]
  %v28 = vlaneseq
  %v29 = vshrl.u32 %v28, 7
  %v30 = vsub.s32 0, %v29
  %v31 = vrot.slane %v26, %v30
  %vm33 = vcmask 261120
  %v35 = vsel %vm33, %v20, 0
  %v38 = vsel %vm33, %v21, 0
  %40 = vmatprep.subr.mxu0 0.0
  %41 = vmatpush1.msra.mxu0 %v22
  %42 = vmatprep.subr.mxu0 0.0
  %43 = vmatpush1.msra.mxu0 %v23
  %44 = vmatprep.subr.mxu0 0.0
  %45 = vmatpush1.msra.mxu0 %v24
  %46 = vmatprep.subr.mxu0 0.0
  %47 = vmatpush1.msra.mxu0 %v25
  %48 = vmatprep.subr.mxu0 0.0
  %49 = vmatpush1.msra.mxu0 0.0
  %50 = vmatprep.subr.mxu0 0.0
  %51 = vmatpush1.msra.mxu0 0.0
  %52 = vmatprep.subr.mxu0 0.0
  %53 = vmatpush1.msra.mxu0 0.0
  %54 = vmatprep.subr.mxu0 0.0
  %55 = vmatpush1.msra.mxu0 0.0
  %56 = vmatprep.subr.mxu0 0.0
  %57 = vmatpush1.msra.mxu0 0.0
  %58 = vmatprep.subr.mxu0 0.0
  %59 = vmatpush1.msra.mxu0 0.0
  %60 = vmatprep.subr.mxu0 0.0
  %61 = vmatpush1.msra.mxu0 0.0
  %62 = vmatprep.subr.mxu0 0.0
  %63 = vmatpush1.msra.mxu0 0.0
  %64 = vmatprep.subr.mxu0 0.0
  %65 = vmatpush1.msra.mxu0 0.0
  %66 = vmatprep.subr.mxu0 0.0
  %67 = vmatpush1.msra.mxu0 0.0
  %68 = vmatprep.subr.mxu0 0.0
  %69 = vmatpush1.msra.mxu0 0.0
  %70 = vmatprep.subr.mxu0 0.0
  %71 = vmatpush1.msra.mxu0 0.0
  %72 = vmatprep.subr.mxu0 0.0
  %73 = vmatpush1.msra.mxu0 0.0
  %74 = vmatprep.subr.mxu0 0.0
  %75 = vmatpush1.msra.mxu0 0.0
  %76 = vmatprep.subr.mxu0 0.0
  %77 = vmatpush1.msra.mxu0 0.0
  %78 = vmatprep.subr.mxu0 0.0
  %79 = vmatpush1.msra.mxu0 0.0
  %80 = vmatprep.subr.mxu0 0.0
  %81 = vmatpush1.msra.mxu0 0.0
  %82 = vmatprep.subr.mxu0 0.0
  %83 = vmatpush1.msra.mxu0 0.0
  %84 = vmatprep.subr.mxu0 0.0
  %85 = vmatpush1.msra.mxu0 0.0
  %86 = vmatprep.subr.mxu0 0.0
  %87 = vmatpush1.msra.mxu0 0.0
  %88 = vmatprep.subr.mxu0 0.0
  %89 = vmatpush1.msra.mxu0 0.0
  %90 = vmatprep.subr.mxu0 0.0
  %91 = vmatpush1.msra.mxu0 0.0
  %92 = vmatprep.subr.mxu0 0.0
  %93 = vmatpush1.msra.mxu0 0.0
  %94 = vmatprep.subr.mxu0 0.0
  %95 = vmatpush1.msra.mxu0 0.0
  %96 = vmatprep.subr.mxu0 0.0
  %97 = vmatpush1.msra.mxu0 0.0
  %98 = vmatprep.subr.mxu0 0.0
  %99 = vmatpush1.msra.mxu0 0.0
  %100 = vmatprep.subr.mxu0 0.0
  %101 = vmatpush1.msra.mxu0 0.0
  %102 = vmatprep.subr.mxu0 0.0
  %103 = vmatpush1.msra.mxu0 0.0
  %104 = vmatprep.mubr.f32.mxu0 0.0
  %105 = vmatmul.mubr.f32.gmra.mrb[0].mxu0 %v35
  %v106 = vpop.f32.mrb[0].mxu0
  %v107 = vadd.f32 %v31, %v106
  %v108 = vpop.f32.mrb[0].mxu0
  %109 = vmatprep.mubr.f32.mxu0 0.0
  %110 = vmatmul.mubr.f32.gmra.mrb[0].mxu0 %v38
  %v111 = vpop.f32.mrb[0].mxu0
  %v112 = vadd.f32 %v31, %v111
  %v113 = vpop.f32.mrb[0].mxu0
  %114 = vdwg.mxu0
  %v115 = vld [vmem:[%s3] sm:$0xff]
  %v116 = vld [vmem:[%s3 + $0x8] sm:$0xff]
  %v117 = vadd.f32 %v107, %v115
  %v118 = vadd.f32 %v112, %v116
  %v119 = vmul.f32 %v117, %v117
  %v120 = vmul.f32 %v118, %v118
  %v121 = vsel %vm33, %v119, 0.0
  %122 = vadd.xlane.f32.xlu0 %v121
  %v123 = vpop.xlane.xlu0 %122
  %v124 = vsel %vm33, %v120, 0.0
  %125 = vadd.xlane.f32.xlu0 %v124
  %v126 = vpop.xlane.xlu0 %125
  %v127 = vrcp.pop 32.0
  %v128 = vmul.f32 %v123, %v127
  %v129 = vmul.f32 %v126, %v127
  %v130 = vadd.f32 %v128, 1e-05
  %v131 = vadd.f32 %v129, 1e-05
  %v132 = vrsqrt.pop %v130
  %v133 = vrsqrt.pop %v131
  %v134 = vmul.f32 %v117, %v132
  %v135 = vmul.f32 %v118, %v133
  %v136 = vld [vmem:[%s4] sm:$0x1]
  %v138 = vlaneseq
  %v139 = vshrl.u32 %v138, 7
  %v140 = vsub.s32 0, %v139
  %v141 = vrot.slane %v136, %v140
  %v143 = vmul.f32 %v134, %v141
  %v144 = vmul.f32 %v135, %v141
  %145 = vst.msk [vmem:[%s5] sm:$0xff] %vm33, %v143
  %146 = vst.msk [vmem:[%s5 + $0x8] sm:$0xff] %vm33, %v144
  // Predicated region
  $region22: #{decoder_layer.10} parent=0 // pred_check
    _
  $region23: #{decoder_layer.10} parent=0 // pred_check_branch
    %148 = sbr.rel (0) target = $region25
  $region24: #{decoder_layer.10} parent=0 // pred_region
    _
  $region25: #{decoder_layer.10} parent=0 // pred_fallthru
    _
  // Predicated region
  $region26: #{decoder_layer.10} parent=0 // pred_check
    _
  $region27: #{decoder_layer.10} parent=0 // pred_check_branch
    %150 = sbr.rel (0) target = $region29
  $region28: #{decoder_layer.10} parent=0 // pred_region
    _
  $region29: #{decoder_layer.10} parent=0 // pred_fallthru
    _

// kernel: decoder_layer.12
$region0: #{decoder_layer.12}
  #allocation0 [shape = 'u32[]', space=smem, size = 0x4, offset = 0x4, fixed_abs, tag = 'smem constant byte address 0x4 - core index']
  #allocation1 [shape = 'u32[144,128]{1,0:T(1,128)}', space=vmem, size = 0x12000, scoped, tag = 'internal scratch']
  %s0 = inlined_call_operand.vmem [shape: f32[16,32], index: 0, kind: input, shape index: {}]
  %s1 = inlined_call_operand.vmem [shape: f32[32,64], index: 1, kind: input, shape index: {}]
  %s2 = inlined_call_operand.vmem [shape: f32[1,64], index: 2, kind: input, shape index: {}]
  %s3 = inlined_call_operand.vmem [shape: f32[16,32], index: 3, kind: output, shape index: {0}]
  %s4 = inlined_call_operand.vmem [shape: f32[16,32], index: 4, kind: output, shape index: {1}]
  %5 = xla_tuple %s3, %s4
  %s6 = sld [smem:[#allocation0]]
  $region30: #{decoder_layer.12} parent=0
    _
  %s8 = ssub.s32 1, %s6
  %s9 = scalar_select 0, %s8, %s6
  // Predicated region
  $region2: #{decoder_layer.12} parent=0 // pred_check
    _
  $region3: #{decoder_layer.12} parent=0 // pred_check_branch
    %11 = sbr.rel (0) target = $region5
  $region4: #{decoder_layer.12} parent=0 // pred_region
    _
  $region5: #{decoder_layer.12} parent=0 // pred_fallthru
    _
  // Predicated region
  $region6: #{decoder_layer.12} parent=0 // pred_check
    _
  $region7: #{decoder_layer.12} parent=0 // pred_check_branch
    %13 = sbr.rel (0) target = $region9
  $region8: #{decoder_layer.12} parent=0 // pred_region
    _
  $region9: #{decoder_layer.12} parent=0 // pred_fallthru
    _
  // Predicated region
  $region10: #{decoder_layer.12} parent=0 // pred_check
    _
  $region11: #{decoder_layer.12} parent=0 // pred_check_branch
    %15 = sbr.rel (0) target = $region13
  $region12: #{decoder_layer.12} parent=0 // pred_region
    _
  $region13: #{decoder_layer.12} parent=0 // pred_fallthru
    _
  %v16 = vld [vmem:[%s0] sm:$0xff]
  %v17 = vld [vmem:[%s0 + $0x8] sm:$0xff]
  %v18 = vld [vmem:[%s1] sm:$0xff]
  %v19 = vld [vmem:[%s1 + $0x8] sm:$0xff]
  %v20 = vld [vmem:[%s1 + $0x10] sm:$0xff]
  %v21 = vld [vmem:[%s1 + $0x18] sm:$0xff]
  %v22 = vld [vmem:[%s2] sm:$0x1]
  %v24 = vlaneseq
  %v25 = vshrl.u32 %v24, 7
  %v26 = vsub.s32 0, %v25
  %v27 = vrot.slane %v22, %v26
  %vm29 = vcmask 261120
  %v31 = vsel %vm29, %v16, 0
  %v34 = vsel %vm29, %v17, 0
  %36 = vmatprep.subr.mxu0 0.0
  %37 = vmatpush1.msra.mxu0 %v18
  %38 = vmatprep.subr.mxu0 0.0
  %39 = vmatpush1.msra.mxu0 %v19
  %40 = vmatprep.subr.mxu0 0.0
  %41 = vmatpush1.msra.mxu0 %v20
  %42 = vmatprep.subr.mxu0 0.0
  %43 = vmatpush1.msra.mxu0 %v21
  %44 = vmatprep.subr.mxu0 0.0
  %45 = vmatpush1.msra.mxu0 0.0
  %46 = vmatprep.subr.mxu0 0.0
  %47 = vmatpush1.msra.mxu0 0.0
  %48 = vmatprep.subr.mxu0 0.0
  %49 = vmatpush1.msra.mxu0 0.0
  %50 = vmatprep.subr.mxu0 0.0
  %51 = vmatpush1.msra.mxu0 0.0
  %52 = vmatprep.subr.mxu0 0.0
  %53 = vmatpush1.msra.mxu0 0.0
  %54 = vmatprep.subr.mxu0 0.0
  %55 = vmatpush1.msra.mxu0 0.0
  %56 = vmatprep.subr.mxu0 0.0
  %57 = vmatpush1.msra.mxu0 0.0
  %58 = vmatprep.subr.mxu0 0.0
  %59 = vmatpush1.msra.mxu0 0.0
  %60 = vmatprep.subr.mxu0 0.0
  %61 = vmatpush1.msra.mxu0 0.0
  %62 = vmatprep.subr.mxu0 0.0
  %63 = vmatpush1.msra.mxu0 0.0
  %64 = vmatprep.subr.mxu0 0.0
  %65 = vmatpush1.msra.mxu0 0.0
  %66 = vmatprep.subr.mxu0 0.0
  %67 = vmatpush1.msra.mxu0 0.0
  %68 = vmatprep.subr.mxu0 0.0
  %69 = vmatpush1.msra.mxu0 0.0
  %70 = vmatprep.subr.mxu0 0.0
  %71 = vmatpush1.msra.mxu0 0.0
  %72 = vmatprep.subr.mxu0 0.0
  %73 = vmatpush1.msra.mxu0 0.0
  %74 = vmatprep.subr.mxu0 0.0
  %75 = vmatpush1.msra.mxu0 0.0
  %76 = vmatprep.subr.mxu0 0.0
  %77 = vmatpush1.msra.mxu0 0.0
  %78 = vmatprep.subr.mxu0 0.0
  %79 = vmatpush1.msra.mxu0 0.0
  %80 = vmatprep.subr.mxu0 0.0
  %81 = vmatpush1.msra.mxu0 0.0
  %82 = vmatprep.subr.mxu0 0.0
  %83 = vmatpush1.msra.mxu0 0.0
  %84 = vmatprep.subr.mxu0 0.0
  %85 = vmatpush1.msra.mxu0 0.0
  %86 = vmatprep.subr.mxu0 0.0
  %87 = vmatpush1.msra.mxu0 0.0
  %88 = vmatprep.subr.mxu0 0.0
  %89 = vmatpush1.msra.mxu0 0.0
  %90 = vmatprep.subr.mxu0 0.0
  %91 = vmatpush1.msra.mxu0 0.0
  %92 = vmatprep.subr.mxu0 0.0
  %93 = vmatpush1.msra.mxu0 0.0
  %94 = vmatprep.subr.mxu0 0.0
  %95 = vmatpush1.msra.mxu0 0.0
  %96 = vmatprep.subr.mxu0 0.0
  %97 = vmatpush1.msra.mxu0 0.0
  %98 = vmatprep.subr.mxu0 0.0
  %99 = vmatpush1.msra.mxu0 0.0
  %100 = vmatprep.mubr.f32.mxu0 0.0
  %101 = vmatmul.mubr.f32.gmra.mrb[0].mxu0 %v31
  %v102 = vpop.f32.mrb[0].mxu0
  %v103 = vadd.f32 %v27, %v102
  %v104 = vpop.f32.mrb[0].mxu0
  %105 = vmatprep.mubr.f32.mxu0 0.0
  %106 = vmatmul.mubr.f32.gmra.mrb[0].mxu0 %v34
  %v107 = vpop.f32.mrb[0].mxu0
  %v108 = vadd.f32 %v27, %v107
  %v109 = vpop.f32.mrb[0].mxu0
  %110 = vdwg.mxu0
  %111 = vst.msk [vmem:[%s3] sm:$0xff] %vm29, %v103
  %112 = vst.msk [vmem:[%s3 + $0x8] sm:$0xff] %vm29, %v108
  %115 = vrot.lane.b32.xlu0 %v103, 96
  %v116 = vpop.permute.xlu0 %115
  %117 = vrot.lane.b32.xlu0 %v108, 96
  %v118 = vpop.permute.xlu0 %117
  %121 = vst.msk [vmem:[%s4] sm:$0xff] %vm29, %v116
  %122 = vst.msk [vmem:[%s4 + $0x8] sm:$0xff] %vm29, %v118
  // Predicated region
  $region14: #{decoder_layer.12} parent=0 // pred_check
    _
  $region15: #{decoder_layer.12} parent=0 // pred_check_branch
    %124 = sbr.rel (0) target = $region17
  $region16: #{decoder_layer.12} parent=0 // pred_region
    _
  $region17: #{decoder_layer.12} parent=0 // pred_fallthru
    _
  // Predicated region
  $region18: #{decoder_layer.12} parent=0 // pred_check
    _
  $region19: #{decoder_layer.12} parent=0 // pred_check_branch
    %126 = sbr.rel (0) target = $region21
  $region20: #{decoder_layer.12} parent=0 // pred_region
    _
  $region21: #{decoder_layer.12} parent=0 // pred_fallthru
    _
  // Predicated region
  $region22: #{decoder_layer.12} parent=0 // pred_check
    _
  $region23: #{decoder_layer.12} parent=0 // pred_check_branch
    %128 = sbr.rel (0) target = $region25
  $region24: #{decoder_layer.12} parent=0 // pred_region
    _
  $region25: #{decoder_layer.12} parent=0 // pred_fallthru
    _
  // Predicated region
  $region26: #{decoder_layer.12} parent=0 // pred_check
    _
  $region27: #{decoder_layer.12} parent=0 // pred_check_branch
    %130 = sbr.rel (0) target = $region29
  $region28: #{decoder_layer.12} parent=0 // pred_region
    _
  $region29: #{decoder_layer.12} parent=0 // pred_fallthru
    _

// kernel: decoder_layer.8
$region0: #{decoder_layer.8}
  #allocation0 [shape = 'u32[]', space=smem, size = 0x4, offset = 0x4, fixed_abs, tag = 'smem constant byte address 0x4 - core index']
  #allocation1 [shape = 'u32[144,128]{1,0:T(1,128)}', space=vmem, size = 0x12000, scoped, tag = 'internal scratch']
  %s0 = inlined_call_operand.vmem [shape: f32[16,32], index: 0, kind: input, shape index: {}]
  %s1 = inlined_call_operand.vmem [shape: f32[32,96], index: 1, kind: input, shape index: {}]
  %s2 = inlined_call_operand.vmem [shape: f32[1,96], index: 2, kind: input, shape index: {}]
  %s3 = inlined_call_operand.vmem [shape: f32[16,32], index: 3, kind: output, shape index: {0}]
  %s4 = inlined_call_operand.vmem [shape: f32[16,32], index: 4, kind: output, shape index: {1}]
  %s5 = inlined_call_operand.vmem [shape: f32[16,32], index: 5, kind: output, shape index: {2}]
  %6 = xla_tuple %s3, %s4, %s5
  %s7 = sld [smem:[#allocation0]]
  $region38: #{decoder_layer.8} parent=0
    _
  %s9 = ssub.s32 1, %s7
  %s10 = scalar_select 0, %s9, %s7
  // Predicated region
  $region2: #{decoder_layer.8} parent=0 // pred_check
    _
  $region3: #{decoder_layer.8} parent=0 // pred_check_branch
    %12 = sbr.rel (0) target = $region5
  $region4: #{decoder_layer.8} parent=0 // pred_region
    _
  $region5: #{decoder_layer.8} parent=0 // pred_fallthru
    _
  // Predicated region
  $region6: #{decoder_layer.8} parent=0 // pred_check
    _
  $region7: #{decoder_layer.8} parent=0 // pred_check_branch
    %14 = sbr.rel (0) target = $region9
  $region8: #{decoder_layer.8} parent=0 // pred_region
    _
  $region9: #{decoder_layer.8} parent=0 // pred_fallthru
    _
  // Predicated region
  $region10: #{decoder_layer.8} parent=0 // pred_check
    _
  $region11: #{decoder_layer.8} parent=0 // pred_check_branch
    %16 = sbr.rel (0) target = $region13
  $region12: #{decoder_layer.8} parent=0 // pred_region
    _
  $region13: #{decoder_layer.8} parent=0 // pred_fallthru
    _
  %v17 = vld [vmem:[%s0] sm:$0xff]
  %v18 = vld [vmem:[%s0 + $0x8] sm:$0xff]
  %v19 = vld [vmem:[%s1] sm:$0xff]
  %v20 = vld [vmem:[%s1 + $0x8] sm:$0xff]
  %v21 = vld [vmem:[%s1 + $0x10] sm:$0xff]
  %v22 = vld [vmem:[%s1 + $0x18] sm:$0xff]
  %v23 = vld [vmem:[%s2] sm:$0x1]
  %v25 = vlaneseq
  %v26 = vshrl.u32 %v25, 7
  %v27 = vsub.s32 0, %v26
  %v28 = vrot.slane %v23, %v27
  %vm30 = vcmask 261120
  %v32 = vsel %vm30, %v17, 0
  %v35 = vsel %vm30, %v18, 0
  %37 = vmatprep.subr.mxu0 0.0
  %38 = vmatpush1.msra.mxu0 %v19
  %39 = vmatprep.subr.mxu0 0.0
  %40 = vmatpush1.msra.mxu0 %v20
  %41 = vmatprep.subr.mxu0 0.0
  %42 = vmatpush1.msra.mxu0 %v21
  %43 = vmatprep.subr.mxu0 0.0
  %44 = vmatpush1.msra.mxu0 %v22
  %45 = vmatprep.subr.mxu0 0.0
  %46 = vmatpush1.msra.mxu0 0.0
  %47 = vmatprep.subr.mxu0 0.0
  %48 = vmatpush1.msra.mxu0 0.0
  %49 = vmatprep.subr.mxu0 0.0
  %50 = vmatpush1.msra.mxu0 0.0
  %51 = vmatprep.subr.mxu0 0.0
  %52 = vmatpush1.msra.mxu0 0.0
  %53 = vmatprep.subr.mxu0 0.0
  %54 = vmatpush1.msra.mxu0 0.0
  %55 = vmatprep.subr.mxu0 0.0
  %56 = vmatpush1.msra.mxu0 0.0
  %57 = vmatprep.subr.mxu0 0.0
  %58 = vmatpush1.msra.mxu0 0.0
  %59 = vmatprep.subr.mxu0 0.0
  %60 = vmatpush1.msra.mxu0 0.0
  %61 = vmatprep.subr.mxu0 0.0
  %62 = vmatpush1.msra.mxu0 0.0
  %63 = vmatprep.subr.mxu0 0.0
  %64 = vmatpush1.msra.mxu0 0.0
  %65 = vmatprep.subr.mxu0 0.0
  %66 = vmatpush1.msra.mxu0 0.0
  %67 = vmatprep.subr.mxu0 0.0
  %68 = vmatpush1.msra.mxu0 0.0
  %69 = vmatprep.subr.mxu0 0.0
  %70 = vmatpush1.msra.mxu0 0.0
  %71 = vmatprep.subr.mxu0 0.0
  %72 = vmatpush1.msra.mxu0 0.0
  %73 = vmatprep.subr.mxu0 0.0
  %74 = vmatpush1.msra.mxu0 0.0
  %75 = vmatprep.subr.mxu0 0.0
  %76 = vmatpush1.msra.mxu0 0.0
  %77 = vmatprep.subr.mxu0 0.0
  %78 = vmatpush1.msra.mxu0 0.0
  %79 = vmatprep.subr.mxu0 0.0
  %80 = vmatpush1.msra.mxu0 0.0
  %81 = vmatprep.subr.mxu0 0.0
  %82 = vmatpush1.msra.mxu0 0.0
  %83 = vmatprep.subr.mxu0 0.0
  %84 = vmatpush1.msra.mxu0 0.0
  %85 = vmatprep.subr.mxu0 0.0
  %86 = vmatpush1.msra.mxu0 0.0
  %87 = vmatprep.subr.mxu0 0.0
  %88 = vmatpush1.msra.mxu0 0.0
  %89 = vmatprep.subr.mxu0 0.0
  %90 = vmatpush1.msra.mxu0 0.0
  %91 = vmatprep.subr.mxu0 0.0
  %92 = vmatpush1.msra.mxu0 0.0
  %93 = vmatprep.subr.mxu0 0.0
  %94 = vmatpush1.msra.mxu0 0.0
  %95 = vmatprep.subr.mxu0 0.0
  %96 = vmatpush1.msra.mxu0 0.0
  %97 = vmatprep.subr.mxu0 0.0
  %98 = vmatpush1.msra.mxu0 0.0
  %99 = vmatprep.subr.mxu0 0.0
  %100 = vmatpush1.msra.mxu0 0.0
  %101 = vmatprep.mubr.f32.mxu0 0.0
  %102 = vmatmul.mubr.f32.gmra.mrb[0].mxu0 %v32
  %v103 = vpop.f32.mrb[0].mxu0
  %v104 = vadd.f32 %v28, %v103
  %v105 = vpop.f32.mrb[0].mxu0
  %106 = vmatprep.mubr.f32.mxu0 0.0
  %107 = vmatmul.mubr.f32.gmra.mrb[0].mxu0 %v35
  %v108 = vpop.f32.mrb[0].mxu0
  %v109 = vadd.f32 %v28, %v108
  %v110 = vpop.f32.mrb[0].mxu0
  %111 = vdwg.mxu0
  %112 = vst.msk [vmem:[%s3] sm:$0xff] %vm30, %v104
  %113 = vst.msk [vmem:[%s3 + $0x8] sm:$0xff] %vm30, %v109
  %116 = vrot.lane.b32.xlu0 %v104, 96
  %v117 = vpop.permute.xlu0 %116
  %118 = vrot.lane.b32.xlu0 %v109, 96
  %v119 = vpop.permute.xlu0 %118
  %122 = vst.msk [vmem:[%s4] sm:$0xff] %vm30, %v117
  %123 = vst.msk [vmem:[%s4 + $0x8] sm:$0xff] %vm30, %v119
  %124 = vrot.lane.b32.xlu0 %v104, 64
  %v125 = vpop.permute.xlu0 %124
  %126 = vrot.lane.b32.xlu0 %v109, 64
  %v127 = vpop.permute.xlu0 %126
  %130 = vst.msk [vmem:[%s5] sm:$0xff] %vm30, %v125
  %131 = vst.msk [vmem:[%s5 + $0x8] sm:$0xff] %vm30, %v127
  // Predicated region
  $region14: #{decoder_layer.8} parent=0 // pred_check
    _
  $region15: #{decoder_layer.8} parent=0 // pred_check_branch
    %133 = sbr.rel (0) target = $region17
  $region16: #{decoder_layer.8} parent=0 // pred_region
    _
  $region17: #{decoder_layer.8} parent=0 // pred_fallthru
    _
  // Predicated region
  $region18: #{decoder_layer.8} parent=0 // pred_check
    _
  $region19: #{decoder_layer.8} parent=0 // pred_check_branch
    %135 = sbr.rel (0) target = $region21
  $region20: #{decoder_layer.8} parent=0 // pred_region
    _
  $region21: #{decoder_layer.8} parent=0 // pred_fallthru
    _
  // Predicated region
  $region22: #{decoder_layer.8} parent=0 // pred_check
    _
  $region23: #{decoder_layer.8} parent=0 // pred_check_branch
    %137 = sbr.rel (0) target = $region25
  $region24: #{decoder_layer.8} parent=0 // pred_region
    _
  $region25: #{decoder_layer.8} parent=0 // pred_fallthru
    _
  // Predicated region
  $region26: #{decoder_layer.8} parent=0 // pred_check
    _
  $region27: #{decoder_layer.8} parent=0 // pred_check_branch
    %139 = sbr.rel (0) target = $region29
  $region28: #{decoder_layer.8} parent=0 // pred_region
    _
  $region29: #{decoder_layer.8} parent=0 // pred_fallthru
    _
  // Predicated region
  $region30: #{decoder_layer.8} parent=0 // pred_check
    _
  $region31: #{decoder_layer.8} parent=0 // pred_check_branch
    %141 = sbr.rel (0) target = $region33
  $region32: #{decoder_layer.8} parent=0 // pred_region
    _
  $region33: #{decoder_layer.8} parent=0 // pred_fallthru
    _
  // Predicated region
  $region34: #{decoder_layer.8} parent=0 // pred_check
    _
  $region35: #{decoder_layer.8} parent=0 // pred_check_branch
    %143 = sbr.rel (0) target = $region37
  $region36: #{decoder_layer.8} parent=0 // pred_region
    _
  $region37: #{decoder_layer.8} parent=0 // pred_fallthru
    _

// kernel: decoder_layer.9
$region0: #{decoder_layer.9}
  #allocation0 [shape = 'u32[]', space=smem, size = 0x4, offset = 0x4, fixed_abs, tag = 'smem constant byte address 0x4 - core index']
  #allocation1 [shape = 'u32[144,128]{1,0:T(1,128)}', space=vmem, size = 0x12000, scoped, tag = 'internal scratch']
  %s0 = inlined_call_operand.vmem [shape: f32[2,8,32], index: 0, kind: input, shape index: {}]
  %s1 = inlined_call_operand.vmem [shape: f32[2,8,32], index: 1, kind: input, shape index: {}]
  %s2 = inlined_call_operand.vmem [shape: f32[2,8,32], index: 2, kind: input, shape index: {}]
  %s3 = inlined_call_operand.vmem [shape: f32[2,1,8,8], index: 3, kind: input, shape index: {}]
  %s4 = inlined_call_operand.vmem [shape: f32[2,8,32], index: 4, kind: output, shape index: {}]
  %s5 = sld [smem:[#allocation0]]
  $region49: #{decoder_layer.9} parent=0
    _
  %s7 = ssub.s32 1, %s5
  %s8 = scalar_select 0, %s7, %s5
  loop: start=0, step=1, limit=4
  $region2: #{decoder_layer.9} parent=0 // loop_pre_header
    _
  $region3: #{decoder_layer.9} parent=0 // loop_header
    %s10 = sphi 0, %s14
    %p11 = scmp.ge.s32.totalorder %s10, 4
    %s20 = sphi 0, %s22
    %s23 = sphi 0, %s20
    %s24 = sphi 0, %s23
    %s40 = sphi 0, %s24
    %s46 = sphi 0, %s48
    %s49 = sphi 0, %s46
    %s50 = sphi 0, %s49
    %s66 = sphi 0, %s50
    %s72 = sphi 0, %s74
    %s75 = sphi 0, %s72
    %s76 = sphi 0, %s75
    %s92 = sphi 0, %s76
    %s98 = sphi 0, %s100
    %s101 = sphi 0, %s98
    %s102 = sphi 0, %s101
    %s118 = sphi 0, %s102
    %s124 = sphi 0, %s126
    %s127 = sphi 0, %s124
    %s128 = sphi 0, %s127
    %s144 = sphi 0, %s128
  $region4: #{decoder_layer.9} parent=0 // loop_header_branch
    %13 = sbr.rel (%p11) target = $region8
  $region5: #{decoder_layer.9} parent=0 // loop_body
    %s15 = ssub.s32 %s10, 1
    %s16 = ssub.s32 %s10, 2
    %s17 = sadd.s32 %s10, 1
    %s18 = ssub.s32 %s10, %s17
    %p19 = scmp.eq.s32.totalorder %s18, 0
    %s21 = sadd.s32 %s20, 1
    %s22 = scalar_select %p19, %s20, %s21
    %p25 = pneg %p19
    %p26 = scmp.eq.s32.totalorder %s10, 1
    %p27 = por %p25, %p26
    %p28 = scmp.ne.s32.totalorder %s20, %s23
    %p29 = scmp.eq.s32.totalorder %s10, 0
    %p30 = por %p28, %p29
    %p31 = scmp.ne.s32.totalorder %s20, %s23
    %p32 = scmp.eq.s32.totalorder %s15, 1
    %p33 = por %p31, %p32
    %p34 = scmp.ne.s32.totalorder %s23, %s24
    %p35 = scmp.eq.s32.totalorder %s15, 0
    %p36 = por %p34, %p35
    %p37 = scmp.ne.s32.totalorder %s23, %s24
    %p38 = scmp.eq.s32.totalorder %s16, 1
    %p39 = por %p37, %p38
    %p41 = scmp.ne.s32.totalorder %s24, %s40
    %p42 = scmp.eq.s32.totalorder %s16, 0
    %p43 = por %p41, %p42
    %s44 = ssub.s32 %s10, %s17
    %p45 = scmp.eq.s32.totalorder %s44, 0
    %s47 = sadd.s32 %s46, 1
    %s48 = scalar_select %p45, %s46, %s47
    %p51 = pneg %p45
    %p52 = scmp.eq.s32.totalorder %s10, 1
    %p53 = por %p51, %p52
    %p54 = scmp.ne.s32.totalorder %s46, %s49
    %p55 = scmp.eq.s32.totalorder %s10, 0
    %p56 = por %p54, %p55
    %p57 = scmp.ne.s32.totalorder %s46, %s49
    %p58 = scmp.eq.s32.totalorder %s15, 1
    %p59 = por %p57, %p58
    %p60 = scmp.ne.s32.totalorder %s49, %s50
    %p61 = scmp.eq.s32.totalorder %s15, 0
    %p62 = por %p60, %p61
    %p63 = scmp.ne.s32.totalorder %s49, %s50
    %p64 = scmp.eq.s32.totalorder %s16, 1
    %p65 = por %p63, %p64
    %p67 = scmp.ne.s32.totalorder %s50, %s66
    %p68 = scmp.eq.s32.totalorder %s16, 0
    %p69 = por %p67, %p68
    %s70 = ssub.s32 %s10, %s17
    %p71 = scmp.eq.s32.totalorder %s70, 0
    %s73 = sadd.s32 %s72, 1
    %s74 = scalar_select %p71, %s72, %s73
    %p77 = pneg %p71
    %p78 = scmp.eq.s32.totalorder %s10, 1
    %p79 = por %p77, %p78
    %p80 = scmp.ne.s32.totalorder %s72, %s75
    %p81 = scmp.eq.s32.totalorder %s10, 0
    %p82 = por %p80, %p81
    %p83 = scmp.ne.s32.totalorder %s72, %s75
    %p84 = scmp.eq.s32.totalorder %s15, 1
    %p85 = por %p83, %p84
    %p86 = scmp.ne.s32.totalorder %s75, %s76
    %p87 = scmp.eq.s32.totalorder %s15, 0
    %p88 = por %p86, %p87
    %p89 = scmp.ne.s32.totalorder %s75, %s76
    %p90 = scmp.eq.s32.totalorder %s16, 1
    %p91 = por %p89, %p90
    %p93 = scmp.ne.s32.totalorder %s76, %s92
    %p94 = scmp.eq.s32.totalorder %s16, 0
    %p95 = por %p93, %p94
    %s96 = ssub.s32 %s10, %s17
    %p97 = scmp.eq.s32.totalorder %s96, 0
    %s99 = sadd.s32 %s98, 1
    %s100 = scalar_select %p97, %s98, %s99
    %p103 = pneg %p97
    %p104 = scmp.eq.s32.totalorder %s10, 1
    %p105 = por %p103, %p104
    %p106 = scmp.ne.s32.totalorder %s98, %s101
    %p107 = scmp.eq.s32.totalorder %s10, 0
    %p108 = por %p106, %p107
    %p109 = scmp.ne.s32.totalorder %s98, %s101
    %p110 = scmp.eq.s32.totalorder %s15, 1
    %p111 = por %p109, %p110
    %p112 = scmp.ne.s32.totalorder %s101, %s102
    %p113 = scmp.eq.s32.totalorder %s15, 0
    %p114 = por %p112, %p113
    %p115 = scmp.ne.s32.totalorder %s101, %s102
    %p116 = scmp.eq.s32.totalorder %s16, 1
    %p117 = por %p115, %p116
    %p119 = scmp.ne.s32.totalorder %s102, %s118
    %p120 = scmp.eq.s32.totalorder %s16, 0
    %p121 = por %p119, %p120
    %s122 = ssub.s32 %s10, %s17
    %p123 = scmp.eq.s32.totalorder %s122, 0
    %s125 = sadd.s32 %s124, 1
    %s126 = scalar_select %p123, %s124, %s125
    %p129 = pneg %p123
    %p130 = scmp.eq.s32.totalorder %s10, 1
    %p131 = por %p129, %p130
    %p132 = scmp.ne.s32.totalorder %s124, %s127
    %p133 = scmp.eq.s32.totalorder %s10, 0
    %p134 = por %p132, %p133
    %p135 = scmp.ne.s32.totalorder %s124, %s127
    %p136 = scmp.eq.s32.totalorder %s15, 1
    %p137 = por %p135, %p136
    %p138 = scmp.ne.s32.totalorder %s127, %s128
    %p139 = scmp.eq.s32.totalorder %s15, 0
    %p140 = por %p138, %p139
    %p141 = scmp.ne.s32.totalorder %s127, %s128
    %p142 = scmp.eq.s32.totalorder %s16, 1
    %p143 = por %p141, %p142
    %p145 = scmp.ne.s32.totalorder %s128, %s144
    %p146 = scmp.eq.s32.totalorder %s16, 0
    %p147 = por %p145, %p146
    %p148 = scmp.le.s32.totalorder 1, %s10
    %p149 = scmp.lt.s32.totalorder %s10, 3
    %p150 = pnand %p148, %p149
    %p151 = pneg %p150
    // Predicated region
    $region9: #{decoder_layer.9} parent=5 // pred_check
      _
    $region10: #{decoder_layer.9} parent=5 // pred_check_branch
      %153 = sbr.rel (%p150) target = $region12
    $region11: #{decoder_layer.9} parent=5 // pred_region
      %s154 = ssub.s32 %s10, 1
    $region12: #{decoder_layer.9} parent=5 // pred_fallthru
      _
    %p155 = scmp.lt.s32.totalorder %s10, 2
    // Predicated region
    $region13: #{decoder_layer.9} parent=5 // pred_check
      %p156 = pneg %p155
    $region14: #{decoder_layer.9} parent=5 // pred_check_branch
      %158 = sbr.rel (%p156) target = $region16
    $region15: #{decoder_layer.9} parent=5 // pred_region
      // Predicated region
      $region17: #{decoder_layer.9} parent=15 // pred_check
        %p159 = pneg %p30
      $region18: #{decoder_layer.9} parent=15 // pred_check_branch
        %161 = sbr.rel (%p159) target = $region20
      $region19: #{decoder_layer.9} parent=15 // pred_region
        %p162 = scmp.lt.s32.totalorder %s10, 1
        %s163 = scalar_select %p162, %s10, 1
        %s164 = smul.addr %s163, 8
        %s165 = scalar_lea.vmem %s0, %s164
      $region20: #{decoder_layer.9} parent=15 // pred_fallthru
        _
      // Predicated region
      $region21: #{decoder_layer.9} parent=15 // pred_check
        %p166 = pneg %p56
      $region22: #{decoder_layer.9} parent=15 // pred_check_branch
        %168 = sbr.rel (%p166) target = $region24
      $region23: #{decoder_layer.9} parent=15 // pred_region
        %p169 = scmp.lt.s32.totalorder %s10, 1
        %s170 = scalar_select %p169, %s10, 1
        %s171 = smul.addr %s170, 8
        %s172 = scalar_lea.vmem %s1, %s171
      $region24: #{decoder_layer.9} parent=15 // pred_fallthru
        _
      // Predicated region
      $region25: #{decoder_layer.9} parent=15 // pred_check
        %p173 = pneg %p82
      $region26: #{decoder_layer.9} parent=15 // pred_check_branch
        %175 = sbr.rel (%p173) target = $region28
      $region27: #{decoder_layer.9} parent=15 // pred_region
        %p176 = scmp.lt.s32.totalorder %s10, 1
        %s177 = scalar_select %p176, %s10, 1
        %s178 = smul.addr %s177, 8
        %s179 = scalar_lea.vmem %s2, %s178
      $region28: #{decoder_layer.9} parent=15 // pred_fallthru
        _
      // Predicated region
      $region29: #{decoder_layer.9} parent=15 // pred_check
        %p180 = pneg %p108
      $region30: #{decoder_layer.9} parent=15 // pred_check_branch
        %182 = sbr.rel (%p180) target = $region32
      $region31: #{decoder_layer.9} parent=15 // pred_region
        %p183 = scmp.lt.s32.totalorder %s10, 1
        %s184 = scalar_select %p183, %s10, 1
        %s185 = smul.addr %s184, 8
        %s186 = scalar_lea.vmem %s3, %s185
      $region32: #{decoder_layer.9} parent=15 // pred_fallthru
        _
    $region16: #{decoder_layer.9} parent=5 // pred_fallthru
      _
    %p187 = scmp.le.s32.totalorder 1, %s10
    %p188 = scmp.lt.s32.totalorder %s10, 3
    %p189 = pnand %p187, %p188
    %p190 = pneg %p189
    // Predicated region
    $region33: #{decoder_layer.9} parent=5 // pred_check
      _
    $region34: #{decoder_layer.9} parent=5 // pred_check_branch
      %192 = sbr.rel (%p189) target = $region36
    $region35: #{decoder_layer.9} parent=5 // pred_region
      %s193 = ssub.s32 %s10, 1
      %p194 = scmp.lt.s32.totalorder %s15, 1
      %s195 = scalar_select %p194, %s15, 1
      %s196 = smul.addr %s195, 8
      %s197 = scalar_lea.vmem %s0, %s196
      %p198 = pneg %p36
      %p199 = pneg %p33
      %p200 = scmp.lt.s32.totalorder %s15, 1
      %s201 = scalar_select %p200, %s15, 1
      %s202 = smul.addr %s201, 8
      %s203 = scalar_lea.vmem %s1, %s202
      %p204 = pneg %p62
      %p205 = pneg %p59
      %p206 = scmp.lt.s32.totalorder %s15, 1
      %s207 = scalar_select %p206, %s15, 1
      %s208 = smul.addr %s207, 8
      %s209 = scalar_lea.vmem %s2, %s208
      %p210 = pneg %p88
      %p211 = pneg %p85
      %p212 = scmp.lt.s32.totalorder %s15, 1
      %s213 = scalar_select %p212, %s15, 1
      %s214 = smul.addr %s213, 8
      %s215 = scalar_lea.vmem %s3, %s214
      %p216 = pneg %p114
      %p217 = pneg %p111
      %p218 = pneg %p140
      %p219 = pneg %p137
      %p220 = scmp.lt.s32.totalorder %s15, 1
      %s221 = scalar_select %p220, %s15, 1
      %s222 = smul.addr %s221, 8
      %s223 = scalar_lea.vmem %s4, %s222
      %p224 = scmp.lt.s32.totalorder %s15, 1
      %s225 = scalar_select %p224, %s15, 1
      %s226 = smul.addr %s225, 8
      %s227 = scalar_lea.vmem %s0, %s226
      %p228 = scmp.lt.s32.totalorder %s15, 1
      %s229 = scalar_select %p228, %s15, 1
      %s230 = smul.addr %s229, 8
      %s231 = scalar_lea.vmem %s1, %s230
      %p232 = scmp.lt.s32.totalorder %s15, 1
      %s233 = scalar_select %p232, %s15, 1
      %s234 = smul.addr %s233, 8
      %s235 = scalar_lea.vmem %s2, %s234
      %p236 = scmp.lt.s32.totalorder %s15, 1
      %s237 = scalar_select %p236, %s15, 1
      %s238 = smul.addr %s237, 8
      %s239 = scalar_lea.vmem %s3, %s238
      %p240 = scmp.lt.s32.totalorder %s15, 1
      %s241 = scalar_select %p240, %s15, 1
      %s242 = smul.addr %s241, 8
      %s243 = scalar_lea.vmem %s4, %s242
      %v244 = vld [vmem:[%s227] sm:$0xff]
      %v245 = vld [vmem:[%s231] sm:$0xff]
      %v246 = vld [vmem:[%s235] sm:$0xff]
      %v247 = vld [vmem:[%s239] sm:$0xff]
      %vm248 = vcmask 64512
      %v250 = vsel %vm248, %v244, 0
      %v253 = vsel %vm248, %v245, 0
      %255 = vmatprep.subr.mxu0 0.0
      %256 = vmatpush1.xpose.msra.mxu0 %v253
      %257 = vmatprep.subr.mxu0 0.0
      %258 = vmatpush1.xpose.msra.mxu0 0.0
      %259 = vmatprep.subr.mxu0 0.0
      %260 = vmatpush1.xpose.msra.mxu0 0.0
      %261 = vmatprep.subr.mxu0 0.0
      %262 = vmatpush1.xpose.msra.mxu0 0.0
      %263 = vmatprep.subr.mxu0 0.0
      %264 = vmatpush1.xpose.msra.mxu0 0.0
      %265 = vmatprep.subr.mxu0 0.0
      %266 = vmatpush1.xpose.msra.mxu0 0.0
      %267 = vmatprep.subr.mxu0 0.0
      %268 = vmatpush1.xpose.msra.mxu0 0.0
      %269 = vmatprep.subr.mxu0 0.0
      %270 = vmatpush1.xpose.msra.mxu0 0.0
      %271 = vmatprep.subr.mxu0 0.0
      %272 = vmatpush1.xpose.msra.mxu0 0.0
      %273 = vmatprep.subr.mxu0 0.0
      %274 = vmatpush1.xpose.msra.mxu0 0.0
      %275 = vmatprep.subr.mxu0 0.0
      %276 = vmatpush1.xpose.msra.mxu0 0.0
      %277 = vmatprep.subr.mxu0 0.0
      %278 = vmatpush1.xpose.msra.mxu0 0.0
      %279 = vmatprep.subr.mxu0 0.0
      %280 = vmatpush1.xpose.msra.mxu0 0.0
      %281 = vmatprep.subr.mxu0 0.0
      %282 = vmatpush1.xpose.msra.mxu0 0.0
      %283 = vmatprep.subr.mxu0 0.0
      %284 = vmatpush1.xpose.msra.mxu0 0.0
      %285 = vmatprep.subr.mxu0 0.0
      %286 = vmatpush1.xpose.msra.mxu0 0.0
      %287 = vmatprep.subr.mxu0 0.0
      %288 = vmatpush1.xpose.msra.mxu0 0.0
      %289 = vmatprep.subr.mxu0 0.0
      %290 = vmatpush1.xpose.msra.mxu0 0.0
      %291 = vmatprep.subr.mxu0 0.0
      %292 = vmatpush1.xpose.msra.mxu0 0.0
      %293 = vmatprep.subr.mxu0 0.0
      %294 = vmatpush1.xpose.msra.mxu0 0.0
      %295 = vmatprep.subr.mxu0 0.0
      %296 = vmatpush1.xpose.msra.mxu0 0.0
      %297 = vmatprep.subr.mxu0 0.0
      %298 = vmatpush1.xpose.msra.mxu0 0.0
      %299 = vmatprep.subr.mxu0 0.0
      %300 = vmatpush1.xpose.msra.mxu0 0.0
      %301 = vmatprep.subr.mxu0 0.0
      %302 = vmatpush1.xpose.msra.mxu0 0.0
      %303 = vmatprep.subr.mxu0 0.0
      %304 = vmatpush1.xpose.msra.mxu0 0.0
      %305 = vmatprep.subr.mxu0 0.0
      %306 = vmatpush1.xpose.msra.mxu0 0.0
      %307 = vmatprep.subr.mxu0 0.0
      %308 = vmatpush1.xpose.msra.mxu0 0.0
      %309 = vmatprep.subr.mxu0 0.0
      %310 = vmatpush1.xpose.msra.mxu0 0.0
      %311 = vmatprep.subr.mxu0 0.0
      %312 = vmatpush1.xpose.msra.mxu0 0.0
      %313 = vmatprep.subr.mxu0 0.0
      %314 = vmatpush1.xpose.msra.mxu0 0.0
      %315 = vmatprep.subr.mxu0 0.0
      %316 = vmatpush1.xpose.msra.mxu0 0.0
      %317 = vmatprep.subr.mxu0 0.0
      %318 = vmatpush1.xpose.msra.mxu0 0.0
      %319 = vmatprep.mubr.f32.mxu0 0.0
      %320 = vmatmul.mubr.f32.gmra.mrb[0].mxu0 %v250
      %v321 = vpop.f32.mrb[0].mxu0
      %v322 = vadd.f32 0.0, %v321
      %v323 = vpop.f32.mrb[0].mxu0
      %324 = vdwg.mxu0
      %v325 = vmul.f32 %v322, 0.35355338
      %vm326 = vcmp.eq.f32.partialorder %v247, 0.0
      %v327 = vsel %vm326, -1e+09, %v325
      %v328 = vsel %vm248, %v327, -inf
      %329 = vmax.xlane.f32.xlu0 %v328
      %v330 = vpop.xlane.xlu0 %329
      %v331 = vsub.f32 %v327, %v330
      %v332 = vmul.f32 %v331, 1.442695
      %v333 = vpow.pop %v332
      %v334 = vsel %vm248, %v333, 0.0
      %335 = vadd.xlane.f32.xlu0 %v334
      %v336 = vpop.xlane.xlu0 %335
      %v337 = vrcp.pop %v336
      %v338 = vmul.f32 %v333, %v337
      %v340 = vsel %vm248, %v338, 0
      %342 = vmatprep.subr.mxu0 0.0
      %343 = vmatpush1.msra.mxu0 %v246
      %344 = vmatprep.subr.mxu0 0.0
      %345 = vmatpush1.msra.mxu0 0.0
      %346 = vmatprep.subr.mxu0 0.0
      %347 = vmatpush1.msra.mxu0 0.0
      %348 = vmatprep.subr.mxu0 0.0
      %349 = vmatpush1.msra.mxu0 0.0
      %350 = vmatprep.subr.mxu0 0.0
      %351 = vmatpush1.msra.mxu0 0.0
      %352 = vmatprep.subr.mxu0 0.0
      %353 = vmatpush1.msra.mxu0 0.0
      %354 = vmatprep.subr.mxu0 0.0
      %355 = vmatpush1.msra.mxu0 0.0
      %356 = vmatprep.subr.mxu0 0.0
      %357 = vmatpush1.msra.mxu0 0.0
      %358 = vmatprep.subr.mxu0 0.0
      %359 = vmatpush1.msra.mxu0 0.0
      %360 = vmatprep.subr.mxu0 0.0
      %361 = vmatpush1.msra.mxu0 0.0
      %362 = vmatprep.subr.mxu0 0.0
      %363 = vmatpush1.msra.mxu0 0.0
      %364 = vmatprep.subr.mxu0 0.0
      %365 = vmatpush1.msra.mxu0 0.0
      %366 = vmatprep.subr.mxu0 0.0
      %367 = vmatpush1.msra.mxu0 0.0
      %368 = vmatprep.subr.mxu0 0.0
      %369 = vmatpush1.msra.mxu0 0.0
      %370 = vmatprep.subr.mxu0 0.0
      %371 = vmatpush1.msra.mxu0 0.0
      %372 = vmatprep.subr.mxu0 0.0
      %373 = vmatpush1.msra.mxu0 0.0
      %374 = vmatprep.subr.mxu0 0.0
      %375 = vmatpush1.msra.mxu0 0.0
      %376 = vmatprep.subr.mxu0 0.0
      %377 = vmatpush1.msra.mxu0 0.0
      %378 = vmatprep.subr.mxu0 0.0
      %379 = vmatpush1.msra.mxu0 0.0
      %380 = vmatprep.subr.mxu0 0.0
      %381 = vmatpush1.msra.mxu0 0.0
      %382 = vmatprep.subr.mxu0 0.0
      %383 = vmatpush1.msra.mxu0 0.0
      %384 = vmatprep.subr.mxu0 0.0
      %385 = vmatpush1.msra.mxu0 0.0
      %386 = vmatprep.subr.mxu0 0.0
      %387 = vmatpush1.msra.mxu0 0.0
      %388 = vmatprep.subr.mxu0 0.0
      %389 = vmatpush1.msra.mxu0 0.0
      %390 = vmatprep.subr.mxu0 0.0
      %391 = vmatpush1.msra.mxu0 0.0
      %392 = vmatprep.subr.mxu0 0.0
      %393 = vmatpush1.msra.mxu0 0.0
      %394 = vmatprep.subr.mxu0 0.0
      %395 = vmatpush1.msra.mxu0 0.0
      %396 = vmatprep.subr.mxu0 0.0
      %397 = vmatpush1.msra.mxu0 0.0
      %398 = vmatprep.subr.mxu0 0.0
      %399 = vmatpush1.msra.mxu0 0.0
      %400 = vmatprep.subr.mxu0 0.0
      %401 = vmatpush1.msra.mxu0 0.0
      %402 = vmatprep.subr.mxu0 0.0
      %403 = vmatpush1.msra.mxu0 0.0
      %404 = vmatprep.subr.mxu0 0.0
      %405 = vmatpush1.msra.mxu0 0.0
      %406 = vmatprep.mubr.f32.mxu0 0.0
      %407 = vmatmul.mubr.f32.gmra.mrb[0].mxu0 %v340
      %v408 = vpop.f32.mrb[0].mxu0
      %v409 = vadd.f32 0.0, %v408
      %v410 = vpop.f32.mrb[0].mxu0
      %411 = vdwg.mxu0
      %412 = vst.msk [vmem:[%s243] sm:$0xff] %vm248, %v409
      %413 = vrot.lane.b32.xlu0 %v244, 120
      %v414 = vpop.permute.xlu0 %413
      %415 = vrot.lane.b32.xlu0 %v245, 120
      %v416 = vpop.permute.xlu0 %415
      %v417 = vsel %vm248, %v414, 0
      %v419 = vsel %vm248, %v416, 0
      %421 = vmatprep.subr.mxu0 0.0
      %422 = vmatpush1.xpose.msra.mxu0 %v419
      %423 = vmatprep.subr.mxu0 0.0
      %424 = vmatpush1.xpose.msra.mxu0 0.0
      %425 = vmatprep.subr.mxu0 0.0
      %426 = vmatpush1.xpose.msra.mxu0 0.0
      %427 = vmatprep.subr.mxu0 0.0
      %428 = vmatpush1.xpose.msra.mxu0 0.0
      %429 = vmatprep.subr.mxu0 0.0
      %430 = vmatpush1.xpose.msra.mxu0 0.0
      %431 = vmatprep.subr.mxu0 0.0
      %432 = vmatpush1.xpose.msra.mxu0 0.0
      %433 = vmatprep.subr.mxu0 0.0
      %434 = vmatpush1.xpose.msra.mxu0 0.0
      %435 = vmatprep.subr.mxu0 0.0
      %436 = vmatpush1.xpose.msra.mxu0 0.0
      %437 = vmatprep.subr.mxu0 0.0
      %438 = vmatpush1.xpose.msra.mxu0 0.0
      %439 = vmatprep.subr.mxu0 0.0
      %440 = vmatpush1.xpose.msra.mxu0 0.0
      %441 = vmatprep.subr.mxu0 0.0
      %442 = vmatpush1.xpose.msra.mxu0 0.0
      %443 = vmatprep.subr.mxu0 0.0
      %444 = vmatpush1.xpose.msra.mxu0 0.0
      %445 = vmatprep.subr.mxu0 0.0
      %446 = vmatpush1.xpose.msra.mxu0 0.0
      %447 = vmatprep.subr.mxu0 0.0
      %448 = vmatpush1.xpose.msra.mxu0 0.0
      %449 = vmatprep.subr.mxu0 0.0
      %450 = vmatpush1.xpose.msra.mxu0 0.0
      %451 = vmatprep.subr.mxu0 0.0
      %452 = vmatpush1.xpose.msra.mxu0 0.0
      %453 = vmatprep.subr.mxu0 0.0
      %454 = vmatpush1.xpose.msra.mxu0 0.0
      %455 = vmatprep.subr.mxu0 0.0
      %456 = vmatpush1.xpose.msra.mxu0 0.0
      %457 = vmatprep.subr.mxu0 0.0
      %458 = vmatpush1.xpose.msra.mxu0 0.0
      %459 = vmatprep.subr.mxu0 0.0
      %460 = vmatpush1.xpose.msra.mxu0 0.0
      %461 = vmatprep.subr.mxu0 0.0
      %462 = vmatpush1.xpose.msra.mxu0 0.0
      %463 = vmatprep.subr.mxu0 0.0
      %464 = vmatpush1.xpose.msra.mxu0 0.0
      %465 = vmatprep.subr.mxu0 0.0
      %466 = vmatpush1.xpose.msra.mxu0 0.0
      %467 = vmatprep.subr.mxu0 0.0
      %468 = vmatpush1.xpose.msra.mxu0 0.0
      %469 = vmatprep.subr.mxu0 0.0
      %470 = vmatpush1.xpose.msra.mxu0 0.0
      %471 = vmatprep.subr.mxu0 0.0
      %472 = vmatpush1.xpose.msra.mxu0 0.0
      %473 = vmatprep.subr.mxu0 0.0
      %474 = vmatpush1.xpose.msra.mxu0 0.0
      %475 = vmatprep.subr.mxu0 0.0
      %476 = vmatpush1.xpose.msra.mxu0 0.0
      %477 = vmatprep.subr.mxu0 0.0
      %478 = vmatpush1.xpose.msra.mxu0 0.0
      %479 = vmatprep.subr.mxu0 0.0
      %480 = vmatpush1.xpose.msra.mxu0 0.0
      %481 = vmatprep.subr.mxu0 0.0
      %482 = vmatpush1.xpose.msra.mxu0 0.0
      %483 = vmatprep.subr.mxu0 0.0
      %484 = vmatpush1.xpose.msra.mxu0 0.0
      %485 = vmatprep.mubr.f32.mxu0 0.0
      %486 = vmatmul.mubr.f32.gmra.mrb[0].mxu0 %v417
      %v487 = vpop.f32.mrb[0].mxu0
      %v488 = vadd.f32 0.0, %v487
      %v489 = vpop.f32.mrb[0].mxu0
      %490 = vdwg.mxu0
      %v491 = vmul.f32 %v488, 0.35355338
      %v492 = vsel %vm326, -1e+09, %v491
      %v493 = vsel %vm248, %v492, -inf
      %494 = vmax.xlane.f32.xlu0 %v493
      %v495 = vpop.xlane.xlu0 %494
      %v496 = vsub.f32 %v492, %v495
      %v497 = vmul.f32 %v496, 1.442695
      %v498 = vpow.pop %v497
      %v499 = vsel %vm248, %v498, 0.0
      %500 = vadd.xlane.f32.xlu0 %v499
      %v501 = vpop.xlane.xlu0 %500
      %v502 = vrcp.pop %v501
      %v503 = vmul.f32 %v498, %v502
      %505 = vrot.lane.b32.xlu0 %v246, 120
      %v506 = vpop.permute.xlu0 %505
      %v509 = vsel %vm248, %v503, 0
      %511 = vmatprep.subr.mxu0 0.0
      %512 = vmatpush1.msra.mxu0 %v506
      %513 = vmatprep.subr.mxu0 0.0
      %514 = vmatpush1.msra.mxu0 0.0
      %515 = vmatprep.subr.mxu0 0.0
      %516 = vmatpush1.msra.mxu0 0.0
      %517 = vmatprep.subr.mxu0 0.0
      %518 = vmatpush1.msra.mxu0 0.0
      %519 = vmatprep.subr.mxu0 0.0
      %520 = vmatpush1.msra.mxu0 0.0
      %521 = vmatprep.subr.mxu0 0.0
      %522 = vmatpush1.msra.mxu0 0.0
      %523 = vmatprep.subr.mxu0 0.0
      %524 = vmatpush1.msra.mxu0 0.0
      %525 = vmatprep.subr.mxu0 0.0
      %526 = vmatpush1.msra.mxu0 0.0
      %527 = vmatprep.subr.mxu0 0.0
      %528 = vmatpush1.msra.mxu0 0.0
      %529 = vmatprep.subr.mxu0 0.0
      %530 = vmatpush1.msra.mxu0 0.0
      %531 = vmatprep.subr.mxu0 0.0
      %532 = vmatpush1.msra.mxu0 0.0
      %533 = vmatprep.subr.mxu0 0.0
      %534 = vmatpush1.msra.mxu0 0.0
      %535 = vmatprep.subr.mxu0 0.0
      %536 = vmatpush1.msra.mxu0 0.0
      %537 = vmatprep.subr.mxu0 0.0
      %538 = vmatpush1.msra.mxu0 0.0
      %539 = vmatprep.subr.mxu0 0.0
      %540 = vmatpush1.msra.mxu0 0.0
      %541 = vmatprep.subr.mxu0 0.0
      %542 = vmatpush1.msra.mxu0 0.0
      %543 = vmatprep.subr.mxu0 0.0
      %544 = vmatpush1.msra.mxu0 0.0
      %545 = vmatprep.subr.mxu0 0.0
      %546 = vmatpush1.msra.mxu0 0.0
      %547 = vmatprep.subr.mxu0 0.0
      %548 = vmatpush1.msra.mxu0 0.0
      %549 = vmatprep.subr.mxu0 0.0
      %550 = vmatpush1.msra.mxu0 0.0
      %551 = vmatprep.subr.mxu0 0.0
      %552 = vmatpush1.msra.mxu0 0.0
      %553 = vmatprep.subr.mxu0 0.0
      %554 = vmatpush1.msra.mxu0 0.0
      %555 = vmatprep.subr.mxu0 0.0
      %556 = vmatpush1.msra.mxu0 0.0
      %557 = vmatprep.subr.mxu0 0.0
      %558 = vmatpush1.msra.mxu0 0.0
      %559 = vmatprep.subr.mxu0 0.0
      %560 = vmatpush1.msra.mxu0 0.0
      %561 = vmatprep.subr.mxu0 0.0
      %562 = vmatpush1.msra.mxu0 0.0
      %563 = vmatprep.subr.mxu0 0.0
      %564 = vmatpush1.msra.mxu0 0.0
      %565 = vmatprep.subr.mxu0 0.0
      %566 = vmatpush1.msra.mxu0 0.0
      %567 = vmatprep.subr.mxu0 0.0
      %568 = vmatpush1.msra.mxu0 0.0
      %569 = vmatprep.subr.mxu0 0.0
      %570 = vmatpush1.msra.mxu0 0.0
      %571 = vmatprep.subr.mxu0 0.0
      %572 = vmatpush1.msra.mxu0 0.0
      %573 = vmatprep.subr.mxu0 0.0
      %574 = vmatpush1.msra.mxu0 0.0
      %575 = vmatprep.mubr.f32.mxu0 0.0
      %576 = vmatmul.mubr.f32.gmra.mrb[0].mxu0 %v509
      %v577 = vpop.f32.mrb[0].mxu0
      %v578 = vadd.f32 0.0, %v577
      %v579 = vpop.f32.mrb[0].mxu0
      %580 = vdwg.mxu0
      %582 = vrot.lane.b32.xlu0 %v578, 8
      %v583 = vpop.permute.xlu0 %582
      %vm585 = vcmask 130112
      %586 = vst.msk [vmem:[%s243] sm:$0xff] %vm585, %v583
      %587 = vrot.lane.b32.xlu0 %v244, 112
      %v588 = vpop.permute.xlu0 %587
      %589 = vrot.lane.b32.xlu0 %v245, 112
      %v590 = vpop.permute.xlu0 %589
      %v591 = vsel %vm248, %v588, 0
      %v593 = vsel %vm248, %v590, 0
      %595 = vmatprep.subr.mxu0 0.0
      %596 = vmatpush1.xpose.msra.mxu0 %v593
      %597 = vmatprep.subr.mxu0 0.0
      %598 = vmatpush1.xpose.msra.mxu0 0.0
      %599 = vmatprep.subr.mxu0 0.0
      %600 = vmatpush1.xpose.msra.mxu0 0.0
      %601 = vmatprep.subr.mxu0 0.0
      %602 = vmatpush1.xpose.msra.mxu0 0.0
      %603 = vmatprep.subr.mxu0 0.0
      %604 = vmatpush1.xpose.msra.mxu0 0.0
      %605 = vmatprep.subr.mxu0 0.0
      %606 = vmatpush1.xpose.msra.mxu0 0.0
      %607 = vmatprep.subr.mxu0 0.0
      %608 = vmatpush1.xpose.msra.mxu0 0.0
      %609 = vmatprep.subr.mxu0 0.0
      %610 = vmatpush1.xpose.msra.mxu0 0.0
      %611 = vmatprep.subr.mxu0 0.0
      %612 = vmatpush1.xpose.msra.mxu0 0.0
      %613 = vmatprep.subr.mxu0 0.0
      %614 = vmatpush1.xpose.msra.mxu0 0.0
      %615 = vmatprep.subr.mxu0 0.0
      %616 = vmatpush1.xpose.msra.mxu0 0.0
      %617 = vmatprep.subr.mxu0 0.0
      %618 = vmatpush1.xpose.msra.mxu0 0.0
      %619 = vmatprep.subr.mxu0 0.0
      %620 = vmatpush1.xpose.msra.mxu0 0.0
      %621 = vmatprep.subr.mxu0 0.0
      %622 = vmatpush1.xpose.msra.mxu0 0.0
      %623 = vmatprep.subr.mxu0 0.0
      %624 = vmatpush1.xpose.msra.mxu0 0.0
      %625 = vmatprep.subr.mxu0 0.0
      %626 = vmatpush1.xpose.msra.mxu0 0.0
      %627 = vmatprep.subr.mxu0 0.0
      %628 = vmatpush1.xpose.msra.mxu0 0.0
      %629 = vmatprep.subr.mxu0 0.0
      %630 = vmatpush1.xpose.msra.mxu0 0.0
      %631 = vmatprep.subr.mxu0 0.0
      %632 = vmatpush1.xpose.msra.mxu0 0.0
      %633 = vmatprep.subr.mxu0 0.0
      %634 = vmatpush1.xpose.msra.mxu0 0.0
      %635 = vmatprep.subr.mxu0 0.0
      %636 = vmatpush1.xpose.msra.mxu0 0.0
      %637 = vmatprep.subr.mxu0 0.0
      %638 = vmatpush1.xpose.msra.mxu0 0.0
      %639 = vmatprep.subr.mxu0 0.0
      %640 = vmatpush1.xpose.msra.mxu0 0.0
      %641 = vmatprep.subr.mxu0 0.0
      %642 = vmatpush1.xpose.msra.mxu0 0.0
      %643 = vmatprep.subr.mxu0 0.0
      %644 = vmatpush1.xpose.msra.mxu0 0.0
      %645 = vmatprep.subr.mxu0 0.0
      %646 = vmatpush1.xpose.msra.mxu0 0.0
      %647 = vmatprep.subr.mxu0 0.0
      %648 = vmatpush1.xpose.msra.mxu0 0.0
      %649 = vmatprep.subr.mxu0 0.0
      %650 = vmatpush1.xpose.msra.mxu0 0.0
      %651 = vmatprep.subr.mxu0 0.0
      %652 = vmatpush1.xpose.msra.mxu0 0.0
      %653 = vmatprep.subr.mxu0 0.0
      %654 = vmatpush1.xpose.msra.mxu0 0.0
      %655 = vmatprep.subr.mxu0 0.0
      %656 = vmatpush1.xpose.msra.mxu0 0.0
      %657 = vmatprep.subr.mxu0 0.0
      %658 = vmatpush1.xpose.msra.mxu0 0.0
      %659 = vmatprep.mubr.f32.mxu0 0.0
      %660 = vmatmul.mubr.f32.gmra.mrb[0].mxu0 %v591
      %v661 = vpop.f32.mrb[0].mxu0
      %v662 = vadd.f32 0.0, %v661
      %v663 = vpop.f32.mrb[0].mxu0
      %664 = vdwg.mxu0
      %v665 = vmul.f32 %v662, 0.35355338
      %v666 = vsel %vm326, -1e+09, %v665
      %v667 = vsel %vm248, %v666, -inf
      %668 = vmax.xlane.f32.xlu0 %v667
      %v669 = vpop.xlane.xlu0 %668
      %v670 = vsub.f32 %v666, %v669
      %v671 = vmul.f32 %v670, 1.442695
      %v672 = vpow.pop %v671
      %v673 = vsel %vm248, %v672, 0.0
      %674 = vadd.xlane.f32.xlu0 %v673
      %v675 = vpop.xlane.xlu0 %674
      %v676 = vrcp.pop %v675
      %v677 = vmul.f32 %v672, %v676
      %678 = vrot.lane.b32.xlu0 %v246, 112
      %v679 = vpop.permute.xlu0 %678
      %v682 = vsel %vm248, %v677, 0
      %684 = vmatprep.subr.mxu0 0.0
      %685 = vmatpush1.msra.mxu0 %v679
      %686 = vmatprep.subr.mxu0 0.0
      %687 = vmatpush1.msra.mxu0 0.0
      %688 = vmatprep.subr.mxu0 0.0
      %689 = vmatpush1.msra.mxu0 0.0
      %690 = vmatprep.subr.mxu0 0.0
      %691 = vmatpush1.msra.mxu0 0.0
      %692 = vmatprep.subr.mxu0 0.0
      %693 = vmatpush1.msra.mxu0 0.0
      %694 = vmatprep.subr.mxu0 0.0
      %695 = vmatpush1.msra.mxu0 0.0
      %696 = vmatprep.subr.mxu0 0.0
      %697 = vmatpush1.msra.mxu0 0.0
      %698 = vmatprep.subr.mxu0 0.0
      %699 = vmatpush1.msra.mxu0 0.0
      %700 = vmatprep.subr.mxu0 0.0
      %701 = vmatpush1.msra.mxu0 0.0
      %702 = vmatprep.subr.mxu0 0.0
      %703 = vmatpush1.msra.mxu0 0.0
      %704 = vmatprep.subr.mxu0 0.0
      %705 = vmatpush1.msra.mxu0 0.0
      %706 = vmatprep.subr.mxu0 0.0
      %707 = vmatpush1.msra.mxu0 0.0
      %708 = vmatprep.subr.mxu0 0.0
      %709 = vmatpush1.msra.mxu0 0.0
      %710 = vmatprep.subr.mxu0 0.0
      %711 = vmatpush1.msra.mxu0 0.0
      %712 = vmatprep.subr.mxu0 0.0
      %713 = vmatpush1.msra.mxu0 0.0
      %714 = vmatprep.subr.mxu0 0.0
      %715 = vmatpush1.msra.mxu0 0.0
      %716 = vmatprep.subr.mxu0 0.0
      %717 = vmatpush1.msra.mxu0 0.0
      %718 = vmatprep.subr.mxu0 0.0
      %719 = vmatpush1.msra.mxu0 0.0
      %720 = vmatprep.subr.mxu0 0.0
      %721 = vmatpush1.msra.mxu0 0.0
      %722 = vmatprep.subr.mxu0 0.0
      %723 = vmatpush1.msra.mxu0 0.0
      %724 = vmatprep.subr.mxu0 0.0
      %725 = vmatpush1.msra.mxu0 0.0
      %726 = vmatprep.subr.mxu0 0.0
      %727 = vmatpush1.msra.mxu0 0.0
      %728 = vmatprep.subr.mxu0 0.0
      %729 = vmatpush1.msra.mxu0 0.0
      %730 = vmatprep.subr.mxu0 0.0
      %731 = vmatpush1.msra.mxu0 0.0
      %732 = vmatprep.subr.mxu0 0.0
      %733 = vmatpush1.msra.mxu0 0.0
      %734 = vmatprep.subr.mxu0 0.0
      %735 = vmatpush1.msra.mxu0 0.0
      %736 = vmatprep.subr.mxu0 0.0
      %737 = vmatpush1.msra.mxu0 0.0
      %738 = vmatprep.subr.mxu0 0.0
      %739 = vmatpush1.msra.mxu0 0.0
      %740 = vmatprep.subr.mxu0 0.0
      %741 = vmatpush1.msra.mxu0 0.0
      %742 = vmatprep.subr.mxu0 0.0
      %743 = vmatpush1.msra.mxu0 0.0
      %744 = vmatprep.subr.mxu0 0.0
      %745 = vmatpush1.msra.mxu0 0.0
      %746 = vmatprep.subr.mxu0 0.0
      %747 = vmatpush1.msra.mxu0 0.0
      %748 = vmatprep.mubr.f32.mxu0 0.0
      %749 = vmatmul.mubr.f32.gmra.mrb[0].mxu0 %v682
      %v750 = vpop.f32.mrb[0].mxu0
      %v751 = vadd.f32 0.0, %v750
      %v752 = vpop.f32.mrb[0].mxu0
      %753 = vdwg.mxu0
      %755 = vrot.lane.b32.xlu0 %v751, 16
      %v756 = vpop.permute.xlu0 %755
      %vm758 = vcmask 195712
      %759 = vst.msk [vmem:[%s243] sm:$0xff] %vm758, %v756
      %760 = vrot.lane.b32.xlu0 %v244, 104
      %v761 = vpop.permute.xlu0 %760
      %762 = vrot.lane.b32.xlu0 %v245, 104
      %v763 = vpop.permute.xlu0 %762
      %v764 = vsel %vm248, %v761, 0
      %v766 = vsel %vm248, %v763, 0
      %768 = vmatprep.subr.mxu0 0.0
      %769 = vmatpush1.xpose.msra.mxu0 %v766
      %770 = vmatprep.subr.mxu0 0.0
      %771 = vmatpush1.xpose.msra.mxu0 0.0
      %772 = vmatprep.subr.mxu0 0.0
      %773 = vmatpush1.xpose.msra.mxu0 0.0
      %774 = vmatprep.subr.mxu0 0.0
      %775 = vmatpush1.xpose.msra.mxu0 0.0
      %776 = vmatprep.subr.mxu0 0.0
      %777 = vmatpush1.xpose.msra.mxu0 0.0
      %778 = vmatprep.subr.mxu0 0.0
      %779 = vmatpush1.xpose.msra.mxu0 0.0
      %780 = vmatprep.subr.mxu0 0.0
      %781 = vmatpush1.xpose.msra.mxu0 0.0
      %782 = vmatprep.subr.mxu0 0.0
      %783 = vmatpush1.xpose.msra.mxu0 0.0
      %784 = vmatprep.subr.mxu0 0.0
      %785 = vmatpush1.xpose.msra.mxu0 0.0
      %786 = vmatprep.subr.mxu0 0.0
      %787 = vmatpush1.xpose.msra.mxu0 0.0
      %788 = vmatprep.subr.mxu0 0.0
      %789 = vmatpush1.xpose.msra.mxu0 0.0
      %790 = vmatprep.subr.mxu0 0.0
      %791 = vmatpush1.xpose.msra.mxu0 0.0
      %792 = vmatprep.subr.mxu0 0.0
      %793 = vmatpush1.xpose.msra.mxu0 0.0
      %794 = vmatprep.subr.mxu0 0.0
      %795 = vmatpush1.xpose.msra.mxu0 0.0
      %796 = vmatprep.subr.mxu0 0.0
      %797 = vmatpush1.xpose.msra.mxu0 0.0
      %798 = vmatprep.subr.mxu0 0.0
      %799 = vmatpush1.xpose.msra.mxu0 0.0
      %800 = vmatprep.subr.mxu0 0.0
      %801 = vmatpush1.xpose.msra.mxu0 0.0
      %802 = vmatprep.subr.mxu0 0.0
      %803 = vmatpush1.xpose.msra.mxu0 0.0
      %804 = vmatprep.subr.mxu0 0.0
      %805 = vmatpush1.xpose.msra.mxu0 0.0
      %806 = vmatprep.subr.mxu0 0.0
      %807 = vmatpush1.xpose.msra.mxu0 0.0
      %808 = vmatprep.subr.mxu0 0.0
      %809 = vmatpush1.xpose.msra.mxu0 0.0
      %810 = vmatprep.subr.mxu0 0.0
      %811 = vmatpush1.xpose.msra.mxu0 0.0
      %812 = vmatprep.subr.mxu0 0.0
      %813 = vmatpush1.xpose.msra.mxu0 0.0
      %814 = vmatprep.subr.mxu0 0.0
      %815 = vmatpush1.xpose.msra.mxu0 0.0
      %816 = vmatprep.subr.mxu0 0.0
      %817 = vmatpush1.xpose.msra.mxu0 0.0
      %818 = vmatprep.subr.mxu0 0.0
      %819 = vmatpush1.xpose.msra.mxu0 0.0
      %820 = vmatprep.subr.mxu0 0.0
      %821 = vmatpush1.xpose.msra.mxu0 0.0
      %822 = vmatprep.subr.mxu0 0.0
      %823 = vmatpush1.xpose.msra.mxu0 0.0
      %824 = vmatprep.subr.mxu0 0.0
      %825 = vmatpush1.xpose.msra.mxu0 0.0
      %826 = vmatprep.subr.mxu0 0.0
      %827 = vmatpush1.xpose.msra.mxu0 0.0
      %828 = vmatprep.subr.mxu0 0.0
      %829 = vmatpush1.xpose.msra.mxu0 0.0
      %830 = vmatprep.subr.mxu0 0.0
      %831 = vmatpush1.xpose.msra.mxu0 0.0
      %832 = vmatprep.mubr.f32.mxu0 0.0
      %833 = vmatmul.mubr.f32.gmra.mrb[0].mxu0 %v764
      %v834 = vpop.f32.mrb[0].mxu0
      %v835 = vadd.f32 0.0, %v834
      %v836 = vpop.f32.mrb[0].mxu0
      %837 = vdwg.mxu0
      %v838 = vmul.f32 %v835, 0.35355338
      %v839 = vsel %vm326, -1e+09, %v838
      %v840 = vsel %vm248, %v839, -inf
      %841 = vmax.xlane.f32.xlu0 %v840
      %v842 = vpop.xlane.xlu0 %841
      %v843 = vsub.f32 %v839, %v842
      %v844 = vmul.f32 %v843, 1.442695
      %v845 = vpow.pop %v844
      %v846 = vsel %vm248, %v845, 0.0
      %847 = vadd.xlane.f32.xlu0 %v846
      %v848 = vpop.xlane.xlu0 %847
      %v849 = vrcp.pop %v848
      %v850 = vmul.f32 %v845, %v849
      %851 = vrot.lane.b32.xlu0 %v246, 104
      %v852 = vpop.permute.xlu0 %851
      %v855 = vsel %vm248, %v850, 0
      %857 = vmatprep.subr.mxu0 0.0
      %858 = vmatpush1.msra.mxu0 %v852
      %859 = vmatprep.subr.mxu0 0.0
      %860 = vmatpush1.msra.mxu0 0.0
      %861 = vmatprep.subr.mxu0 0.0
      %862 = vmatpush1.msra.mxu0 0.0
      %863 = vmatprep.subr.mxu0 0.0
      %864 = vmatpush1.msra.mxu0 0.0
      %865 = vmatprep.subr.mxu0 0.0
      %866 = vmatpush1.msra.mxu0 0.0
      %867 = vmatprep.subr.mxu0 0.0
      %868 = vmatpush1.msra.mxu0 0.0
      %869 = vmatprep.subr.mxu0 0.0
      %870 = vmatpush1.msra.mxu0 0.0
      %871 = vmatprep.subr.mxu0 0.0
      %872 = vmatpush1.msra.mxu0 0.0
      %873 = vmatprep.subr.mxu0 0.0
      %874 = vmatpush1.msra.mxu0 0.0
      %875 = vmatprep.subr.mxu0 0.0
      %876 = vmatpush1.msra.mxu0 0.0
      %877 = vmatprep.subr.mxu0 0.0
      %878 = vmatpush1.msra.mxu0 0.0
      %879 = vmatprep.subr.mxu0 0.0
      %880 = vmatpush1.msra.mxu0 0.0
      %881 = vmatprep.subr.mxu0 0.0
      %882 = vmatpush1.msra.mxu0 0.0
      %883 = vmatprep.subr.mxu0 0.0
      %884 = vmatpush1.msra.mxu0 0.0
      %885 = vmatprep.subr.mxu0 0.0
      %886 = vmatpush1.msra.mxu0 0.0
      %887 = vmatprep.subr.mxu0 0.0
      %888 = vmatpush1.msra.mxu0 0.0
      %889 = vmatprep.subr.mxu0 0.0
      %890 = vmatpush1.msra.mxu0 0.0
      %891 = vmatprep.subr.mxu0 0.0
      %892 = vmatpush1.msra.mxu0 0.0
      %893 = vmatprep.subr.mxu0 0.0
      %894 = vmatpush1.msra.mxu0 0.0
      %895 = vmatprep.subr.mxu0 0.0
      %896 = vmatpush1.msra.mxu0 0.0
      %897 = vmatprep.subr.mxu0 0.0
      %898 = vmatpush1.msra.mxu0 0.0
      %899 = vmatprep.subr.mxu0 0.0
      %900 = vmatpush1.msra.mxu0 0.0
      %901 = vmatprep.subr.mxu0 0.0
      %902 = vmatpush1.msra.mxu0 0.0
      %903 = vmatprep.subr.mxu0 0.0
      %904 = vmatpush1.msra.mxu0 0.0
      %905 = vmatprep.subr.mxu0 0.0
      %906 = vmatpush1.msra.mxu0 0.0
      %907 = vmatprep.subr.mxu0 0.0
      %908 = vmatpush1.msra.mxu0 0.0
      %909 = vmatprep.subr.mxu0 0.0
      %910 = vmatpush1.msra.mxu0 0.0
      %911 = vmatprep.subr.mxu0 0.0
      %912 = vmatpush1.msra.mxu0 0.0
      %913 = vmatprep.subr.mxu0 0.0
      %914 = vmatpush1.msra.mxu0 0.0
      %915 = vmatprep.subr.mxu0 0.0
      %916 = vmatpush1.msra.mxu0 0.0
      %917 = vmatprep.subr.mxu0 0.0
      %918 = vmatpush1.msra.mxu0 0.0
      %919 = vmatprep.subr.mxu0 0.0
      %920 = vmatpush1.msra.mxu0 0.0
      %921 = vmatprep.mubr.f32.mxu0 0.0
      %922 = vmatmul.mubr.f32.gmra.mrb[0].mxu0 %v855
      %v923 = vpop.f32.mrb[0].mxu0
      %v924 = vadd.f32 0.0, %v923
      %v925 = vpop.f32.mrb[0].mxu0
      %926 = vdwg.mxu0
      %928 = vrot.lane.b32.xlu0 %v924, 24
      %v929 = vpop.permute.xlu0 %928
      %vm931 = vcmask 261312
      %932 = vst.msk [vmem:[%s243] sm:$0xff] %vm931, %v929
      %p933 = scmp.lt.s32.totalorder %s15, 1
      %s934 = scalar_select %p933, %s15, 1
      %s935 = smul.addr %s934, 8
      %s936 = scalar_lea.vmem %s4, %s935
      // Predicated region
      $region37: #{decoder_layer.9} parent=35 // pred_check
        %p937 = pneg %p137
      $region38: #{decoder_layer.9} parent=35 // pred_check_branch
        %939 = sbr.rel (%p937) target = $region40
      $region39: #{decoder_layer.9} parent=35 // pred_region
        _
      $region40: #{decoder_layer.9} parent=35 // pred_fallthru
        _
    $region36: #{decoder_layer.9} parent=5 // pred_fallthru
      _
    %p940 = scmp.le.s32.totalorder 2, %s10
    // Predicated region
    $region41: #{decoder_layer.9} parent=5 // pred_check
      %p941 = pneg %p940
    $region42: #{decoder_layer.9} parent=5 // pred_check_branch
      %943 = sbr.rel (%p941) target = $region44
    $region43: #{decoder_layer.9} parent=5 // pred_region
      %s944 = ssub.s32 %s10, 2
      // Predicated region
      $region45: #{decoder_layer.9} parent=43 // pred_check
        %p945 = pneg %p143
      $region46: #{decoder_layer.9} parent=43 // pred_check_branch
        %947 = sbr.rel (%p945) target = $region48
      $region47: #{decoder_layer.9} parent=43 // pred_region
        %p948 = scmp.lt.s32.totalorder %s16, 1
        %s949 = scalar_select %p948, %s16, 1
        %s950 = smul.addr %s949, 8
        %s951 = scalar_lea.vmem %s4, %s950
      $region48: #{decoder_layer.9} parent=43 // pred_fallthru
        _
    $region44: #{decoder_layer.9} parent=5 // pred_fallthru
      _
  $region6: #{decoder_layer.9} parent=0 // loop_footer
    %s14 = sadd.s32 1, %s10
  $region7: #{decoder_layer.9} parent=0 // loop_footer_branch
    %9 = sbr.rel target = $region3
  $region8: #{decoder_layer.9} parent=0 // loop_exit
    _

// kernel: decoder_layer.11
$region0: #{decoder_layer.11}
  #allocation0 [shape = 'u32[]', space=smem, size = 0x4, offset = 0x4, fixed_abs, tag = 'smem constant byte address 0x4 - core index']
  #allocation1 [shape = 'u32[144,128]{1,0:T(1,128)}', space=vmem, size = 0x12000, scoped, tag = 'internal scratch']
  %s0 = inlined_call_operand.vmem [shape: f32[16,32], index: 0, kind: input, shape index: {}]
  %s1 = inlined_call_operand.vmem [shape: f32[32,32], index: 1, kind: input, shape index: {}]
  %s2 = inlined_call_operand.vmem [shape: f32[1,32], index: 2, kind: input, shape index: {}]
  %s3 = inlined_call_operand.vmem [shape: f32[16,32], index: 3, kind: output, shape index: {}]
  %s4 = sld [smem:[#allocation0]]
  $region22: #{decoder_layer.11} parent=0
    _
  %s6 = ssub.s32 1, %s4
  %s7 = scalar_select 0, %s6, %s4
  // Predicated region
  $region2: #{decoder_layer.11} parent=0 // pred_check
    _
  $region3: #{decoder_layer.11} parent=0 // pred_check_branch
    %9 = sbr.rel (0) target = $region5
  $region4: #{decoder_layer.11} parent=0 // pred_region
    _
  $region5: #{decoder_layer.11} parent=0 // pred_fallthru
    _
  // Predicated region
  $region6: #{decoder_layer.11} parent=0 // pred_check
    _
  $region7: #{decoder_layer.11} parent=0 // pred_check_branch
    %11 = sbr.rel (0) target = $region9
  $region8: #{decoder_layer.11} parent=0 // pred_region
    _
  $region9: #{decoder_layer.11} parent=0 // pred_fallthru
    _
  // Predicated region
  $region10: #{decoder_layer.11} parent=0 // pred_check
    _
  $region11: #{decoder_layer.11} parent=0 // pred_check_branch
    %13 = sbr.rel (0) target = $region13
  $region12: #{decoder_layer.11} parent=0 // pred_region
    _
  $region13: #{decoder_layer.11} parent=0 // pred_fallthru
    _
  %v14 = vld [vmem:[%s0] sm:$0xff]
  %v15 = vld [vmem:[%s0 + $0x8] sm:$0xff]
  %v16 = vld [vmem:[%s1] sm:$0xff]
  %v17 = vld [vmem:[%s1 + $0x8] sm:$0xff]
  %v18 = vld [vmem:[%s1 + $0x10] sm:$0xff]
  %v19 = vld [vmem:[%s1 + $0x18] sm:$0xff]
  %v20 = vld [vmem:[%s2] sm:$0x1]
  %v22 = vlaneseq
  %v23 = vshrl.u32 %v22, 7
  %v24 = vsub.s32 0, %v23
  %v25 = vrot.slane %v20, %v24
  %vm27 = vcmask 261120
  %v29 = vsel %vm27, %v14, 0
  %v32 = vsel %vm27, %v15, 0
  %34 = vmatprep.subr.mxu0 0.0
  %35 = vmatpush1.msra.mxu0 %v16
  %36 = vmatprep.subr.mxu0 0.0
  %37 = vmatpush1.msra.mxu0 %v17
  %38 = vmatprep.subr.mxu0 0.0
  %39 = vmatpush1.msra.mxu0 %v18
  %40 = vmatprep.subr.mxu0 0.0
  %41 = vmatpush1.msra.mxu0 %v19
  %42 = vmatprep.subr.mxu0 0.0
  %43 = vmatpush1.msra.mxu0 0.0
  %44 = vmatprep.subr.mxu0 0.0
  %45 = vmatpush1.msra.mxu0 0.0
  %46 = vmatprep.subr.mxu0 0.0
  %47 = vmatpush1.msra.mxu0 0.0
  %48 = vmatprep.subr.mxu0 0.0
  %49 = vmatpush1.msra.mxu0 0.0
  %50 = vmatprep.subr.mxu0 0.0
  %51 = vmatpush1.msra.mxu0 0.0
  %52 = vmatprep.subr.mxu0 0.0
  %53 = vmatpush1.msra.mxu0 0.0
  %54 = vmatprep.subr.mxu0 0.0
  %55 = vmatpush1.msra.mxu0 0.0
  %56 = vmatprep.subr.mxu0 0.0
  %57 = vmatpush1.msra.mxu0 0.0
  %58 = vmatprep.subr.mxu0 0.0
  %59 = vmatpush1.msra.mxu0 0.0
  %60 = vmatprep.subr.mxu0 0.0
  %61 = vmatpush1.msra.mxu0 0.0
  %62 = vmatprep.subr.mxu0 0.0
  %63 = vmatpush1.msra.mxu0 0.0
  %64 = vmatprep.subr.mxu0 0.0
  %65 = vmatpush1.msra.mxu0 0.0
  %66 = vmatprep.subr.mxu0 0.0
  %67 = vmatpush1.msra.mxu0 0.0
  %68 = vmatprep.subr.mxu0 0.0
  %69 = vmatpush1.msra.mxu0 0.0
  %70 = vmatprep.subr.mxu0 0.0
  %71 = vmatpush1.msra.mxu0 0.0
  %72 = vmatprep.subr.mxu0 0.0
  %73 = vmatpush1.msra.mxu0 0.0
  %74 = vmatprep.subr.mxu0 0.0
  %75 = vmatpush1.msra.mxu0 0.0
  %76 = vmatprep.subr.mxu0 0.0
  %77 = vmatpush1.msra.mxu0 0.0
  %78 = vmatprep.subr.mxu0 0.0
  %79 = vmatpush1.msra.mxu0 0.0
  %80 = vmatprep.subr.mxu0 0.0
  %81 = vmatpush1.msra.mxu0 0.0
  %82 = vmatprep.subr.mxu0 0.0
  %83 = vmatpush1.msra.mxu0 0.0
  %84 = vmatprep.subr.mxu0 0.0
  %85 = vmatpush1.msra.mxu0 0.0
  %86 = vmatprep.subr.mxu0 0.0
  %87 = vmatpush1.msra.mxu0 0.0
  %88 = vmatprep.subr.mxu0 0.0
  %89 = vmatpush1.msra.mxu0 0.0
  %90 = vmatprep.subr.mxu0 0.0
  %91 = vmatpush1.msra.mxu0 0.0
  %92 = vmatprep.subr.mxu0 0.0
  %93 = vmatpush1.msra.mxu0 0.0
  %94 = vmatprep.subr.mxu0 0.0
  %95 = vmatpush1.msra.mxu0 0.0
  %96 = vmatprep.subr.mxu0 0.0
  %97 = vmatpush1.msra.mxu0 0.0
  %98 = vmatprep.mubr.f32.mxu0 0.0
  %99 = vmatmul.mubr.f32.gmra.mrb[0].mxu0 %v29
  %v100 = vpop.f32.mrb[0].mxu0
  %v101 = vadd.f32 %v25, %v100
  %v102 = vpop.f32.mrb[0].mxu0
  %103 = vmatprep.mubr.f32.mxu0 0.0
  %104 = vmatmul.mubr.f32.gmra.mrb[0].mxu0 %v32
  %v105 = vpop.f32.mrb[0].mxu0
  %v106 = vadd.f32 %v25, %v105
  %v107 = vpop.f32.mrb[0].mxu0
  %108 = vdwg.mxu0
  %109 = vst.msk [vmem:[%s3] sm:$0xff] %vm27, %v101
  %110 = vst.msk [vmem:[%s3 + $0x8] sm:$0xff] %vm27, %v106
  // Predicated region
  $region14: #{decoder_layer.11} parent=0 // pred_check
    _
  $region15: #{decoder_layer.11} parent=0 // pred_check_branch
    %112 = sbr.rel (0) target = $region17
  $region16: #{decoder_layer.11} parent=0 // pred_region
    _
  $region17: #{decoder_layer.11} parent=0 // pred_fallthru
    _
  // Predicated region
  $region18: #{decoder_layer.11} parent=0 // pred_check
    _
  $region19: #{decoder_layer.11} parent=0 // pred_check_branch
    %114 = sbr.rel (0) target = $region21
  $region20: #{decoder_layer.11} parent=0 // pred_region
    _
  $region21: #{decoder_layer.11} parent=0 // pred_fallthru
    _

// kernel: decoder_layer.15
$region0: #{decoder_layer.15}
  #allocation0 [shape = 'u32[]', space=smem, size = 0x4, offset = 0x4, fixed_abs, tag = 'smem constant byte address 0x4 - core index']
  #allocation1 [shape = 'u32[144,128]{1,0:T(1,128)}', space=vmem, size = 0x12000, scoped, tag = 'internal scratch']
  %s0 = inlined_call_operand.vmem [shape: f32[16,32], index: 0, kind: input, shape index: {}]
  %s1 = inlined_call_operand.vmem [shape: f32[32,64], index: 1, kind: input, shape index: {}]
  %s2 = inlined_call_operand.vmem [shape: f32[1,64], index: 2, kind: input, shape index: {}]
  %s3 = inlined_call_operand.vmem [shape: f32[64,32], index: 3, kind: input, shape index: {}]
  %s4 = inlined_call_operand.vmem [shape: f32[1,32], index: 4, kind: input, shape index: {}]
  %s5 = inlined_call_operand.vmem [shape: f32[1,32], index: 5, kind: input, shape index: {}]
  %s6 = inlined_call_operand.hbm [shape: f32[16,32], index: 6, kind: output, shape index: {}]
  %s7 = sld [smem:[#allocation0]]
  $region34: #{decoder_layer.15} parent=0
    _
  %s9 = ssub.s32 1, %s7
  %s10 = scalar_select 0, %s9, %s7
  $region1: #{decoder_layer.15} parent=0
    #allocation2 [shape = 'u8[8192]{0}', space=vmem, size = 0x2000, scoped, tag = 'output window, operand 0, single buffered']
    #allocation3 [shape = 's32[1]{0}', space=sflag, size = 0x4, scoped, tag = 'scoped memory for decoder_layer.15']
    %11 = vsyncpa [#allocation3], 0
    // Predicated region
    $region2: #{decoder_layer.15} parent=1 // pred_check
      _
    $region3: #{decoder_layer.15} parent=1 // pred_check_branch
      %13 = sbr.rel (0) target = $region5
    $region4: #{decoder_layer.15} parent=1 // pred_region
      _
    $region5: #{decoder_layer.15} parent=1 // pred_fallthru
      _
    // Predicated region
    $region6: #{decoder_layer.15} parent=1 // pred_check
      _
    $region7: #{decoder_layer.15} parent=1 // pred_check_branch
      %15 = sbr.rel (0) target = $region9
    $region8: #{decoder_layer.15} parent=1 // pred_region
      _
    $region9: #{decoder_layer.15} parent=1 // pred_fallthru
      _
    // Predicated region
    $region10: #{decoder_layer.15} parent=1 // pred_check
      _
    $region11: #{decoder_layer.15} parent=1 // pred_check_branch
      %17 = sbr.rel (0) target = $region13
    $region12: #{decoder_layer.15} parent=1 // pred_region
      _
    $region13: #{decoder_layer.15} parent=1 // pred_fallthru
      _
    // Predicated region
    $region14: #{decoder_layer.15} parent=1 // pred_check
      _
    $region15: #{decoder_layer.15} parent=1 // pred_check_branch
      %19 = sbr.rel (0) target = $region17
    $region16: #{decoder_layer.15} parent=1 // pred_region
      _
    $region17: #{decoder_layer.15} parent=1 // pred_fallthru
      _
    // Predicated region
    $region18: #{decoder_layer.15} parent=1 // pred_check
      _
    $region19: #{decoder_layer.15} parent=1 // pred_check_branch
      %21 = sbr.rel (0) target = $region21
    $region20: #{decoder_layer.15} parent=1 // pred_region
      _
    $region21: #{decoder_layer.15} parent=1 // pred_fallthru
      _
    // Predicated region
    $region22: #{decoder_layer.15} parent=1 // pred_check
      _
    $region23: #{decoder_layer.15} parent=1 // pred_check_branch
      %23 = sbr.rel (0) target = $region25
    $region24: #{decoder_layer.15} parent=1 // pred_region
      _
    $region25: #{decoder_layer.15} parent=1 // pred_fallthru
      _
    %v24 = vld [vmem:[%s0] sm:$0xff]
    %v25 = vld [vmem:[%s0 + $0x8] sm:$0xff]
    %v26 = vld [vmem:[%s1] sm:$0xff]
    %v27 = vld [vmem:[%s1 + $0x8] sm:$0xff]
    %v28 = vld [vmem:[%s1 + $0x10] sm:$0xff]
    %v29 = vld [vmem:[%s1 + $0x18] sm:$0xff]
    %v30 = vld [vmem:[%s2] sm:$0x1]
    %v32 = vlaneseq
    %v33 = vshrl.u32 %v32, 7
    %v34 = vsub.s32 0, %v33
    %v35 = vrot.slane %v30, %v34
    %vm37 = vcmask 261120
    %v39 = vsel %vm37, %v24, 0
    %v42 = vsel %vm37, %v25, 0
    %44 = vmatprep.subr.mxu0 0.0
    %45 = vmatpush1.msra.mxu0 %v26
    %46 = vmatprep.subr.mxu0 0.0
    %47 = vmatpush1.msra.mxu0 %v27
    %48 = vmatprep.subr.mxu0 0.0
    %49 = vmatpush1.msra.mxu0 %v28
    %50 = vmatprep.subr.mxu0 0.0
    %51 = vmatpush1.msra.mxu0 %v29
    %52 = vmatprep.subr.mxu0 0.0
    %53 = vmatpush1.msra.mxu0 0.0
    %54 = vmatprep.subr.mxu0 0.0
    %55 = vmatpush1.msra.mxu0 0.0
    %56 = vmatprep.subr.mxu0 0.0
    %57 = vmatpush1.msra.mxu0 0.0
    %58 = vmatprep.subr.mxu0 0.0
    %59 = vmatpush1.msra.mxu0 0.0
    %60 = vmatprep.subr.mxu0 0.0
    %61 = vmatpush1.msra.mxu0 0.0
    %62 = vmatprep.subr.mxu0 0.0
    %63 = vmatpush1.msra.mxu0 0.0
    %64 = vmatprep.subr.mxu0 0.0
    %65 = vmatpush1.msra.mxu0 0.0
    %66 = vmatprep.subr.mxu0 0.0
    %67 = vmatpush1.msra.mxu0 0.0
    %68 = vmatprep.subr.mxu0 0.0
    %69 = vmatpush1.msra.mxu0 0.0
    %70 = vmatprep.subr.mxu0 0.0
    %71 = vmatpush1.msra.mxu0 0.0
    %72 = vmatprep.subr.mxu0 0.0
    %73 = vmatpush1.msra.mxu0 0.0
    %74 = vmatprep.subr.mxu0 0.0
    %75 = vmatpush1.msra.mxu0 0.0
    %76 = vmatprep.subr.mxu0 0.0
    %77 = vmatpush1.msra.mxu0 0.0
    %78 = vmatprep.subr.mxu0 0.0
    %79 = vmatpush1.msra.mxu0 0.0
    %80 = vmatprep.subr.mxu0 0.0
    %81 = vmatpush1.msra.mxu0 0.0
    %82 = vmatprep.subr.mxu0 0.0
    %83 = vmatpush1.msra.mxu0 0.0
    %84 = vmatprep.subr.mxu0 0.0
    %85 = vmatpush1.msra.mxu0 0.0
    %86 = vmatprep.subr.mxu0 0.0
    %87 = vmatpush1.msra.mxu0 0.0
    %88 = vmatprep.subr.mxu0 0.0
    %89 = vmatpush1.msra.mxu0 0.0
    %90 = vmatprep.subr.mxu0 0.0
    %91 = vmatpush1.msra.mxu0 0.0
    %92 = vmatprep.subr.mxu0 0.0
    %93 = vmatpush1.msra.mxu0 0.0
    %94 = vmatprep.subr.mxu0 0.0
    %95 = vmatpush1.msra.mxu0 0.0
    %96 = vmatprep.subr.mxu0 0.0
    %97 = vmatpush1.msra.mxu0 0.0
    %98 = vmatprep.subr.mxu0 0.0
    %99 = vmatpush1.msra.mxu0 0.0
    %100 = vmatprep.subr.mxu0 0.0
    %101 = vmatpush1.msra.mxu0 0.0
    %102 = vmatprep.subr.mxu0 0.0
    %103 = vmatpush1.msra.mxu0 0.0
    %104 = vmatprep.subr.mxu0 0.0
    %105 = vmatpush1.msra.mxu0 0.0
    %106 = vmatprep.subr.mxu0 0.0
    %107 = vmatpush1.msra.mxu0 0.0
    %108 = vmatprep.mubr.f32.mxu0 0.0
    %109 = vmatmul.mubr.f32.gmra.mrb[0].mxu0 %v39
    %v110 = vpop.f32.mrb[0].mxu0
    %v111 = vadd.f32 %v35, %v110
    %v112 = vpop.f32.mrb[0].mxu0
    %113 = vmatprep.mubr.f32.mxu0 0.0
    %114 = vmatmul.mubr.f32.gmra.mrb[0].mxu0 %v42
    %v115 = vpop.f32.mrb[0].mxu0
    %v116 = vadd.f32 %v35, %v115
    %v117 = vpop.f32.mrb[0].mxu0
    %118 = vdwg.mxu0
    %v119 = vmax.f32 %v111, 0.0
    %v120 = vmax.f32 %v116, 0.0
    %v121 = vld [vmem:[%s3] sm:$0xff]
    %v122 = vld [vmem:[%s3 + $0x8] sm:$0xff]
    %v123 = vld [vmem:[%s3 + $0x10] sm:$0xff]
    %v124 = vld [vmem:[%s3 + $0x18] sm:$0xff]
    %v125 = vld [vmem:[%s3 + $0x20] sm:$0xff]
    %v126 = vld [vmem:[%s3 + $0x28] sm:$0xff]
    %v127 = vld [vmem:[%s3 + $0x30] sm:$0xff]
    %v128 = vld [vmem:[%s3 + $0x38] sm:$0xff]
    %v129 = vld [vmem:[%s4] sm:$0x1]
    %v131 = vlaneseq
    %v132 = vshrl.u32 %v131, 7
    %v133 = vsub.s32 0, %v132
    %v134 = vrot.slane %v129, %v133
    %vm136 = vcmask 523264
    %v138 = vsel %vm136, %v119, 0
    %v141 = vsel %vm136, %v120, 0
    %143 = vmatprep.subr.mxu0 0.0
    %144 = vmatpush1.msra.mxu0 %v121
    %145 = vmatprep.subr.mxu0 0.0
    %146 = vmatpush1.msra.mxu0 %v122
    %147 = vmatprep.subr.mxu0 0.0
    %148 = vmatpush1.msra.mxu0 %v123
    %149 = vmatprep.subr.mxu0 0.0
    %150 = vmatpush1.msra.mxu0 %v124
    %151 = vmatprep.subr.mxu0 0.0
    %152 = vmatpush1.msra.mxu0 %v125
    %153 = vmatprep.subr.mxu0 0.0
    %154 = vmatpush1.msra.mxu0 %v126
    %155 = vmatprep.subr.mxu0 0.0
    %156 = vmatpush1.msra.mxu0 %v127
    %157 = vmatprep.subr.mxu0 0.0
    %158 = vmatpush1.msra.mxu0 %v128
    %159 = vmatprep.subr.mxu0 0.0
    %160 = vmatpush1.msra.mxu0 0.0
    %161 = vmatprep.subr.mxu0 0.0
    %162 = vmatpush1.msra.mxu0 0.0
    %163 = vmatprep.subr.mxu0 0.0
    %164 = vmatpush1.msra.mxu0 0.0
    %165 = vmatprep.subr.mxu0 0.0
    %166 = vmatpush1.msra.mxu0 0.0
    %167 = vmatprep.subr.mxu0 0.0
    %168 = vmatpush1.msra.mxu0 0.0
    %169 = vmatprep.subr.mxu0 0.0
    %170 = vmatpush1.msra.mxu0 0.0
    %171 = vmatprep.subr.mxu0 0.0
    %172 = vmatpush1.msra.mxu0 0.0
    %173 = vmatprep.subr.mxu0 0.0
    %174 = vmatpush1.msra.mxu0 0.0
    %175 = vmatprep.subr.mxu0 0.0
    %176 = vmatpush1.msra.mxu0 0.0
    %177 = vmatprep.subr.mxu0 0.0
    %178 = vmatpush1.msra.mxu0 0.0
    %179 = vmatprep.subr.mxu0 0.0
    %180 = vmatpush1.msra.mxu0 0.0
    %181 = vmatprep.subr.mxu0 0.0
    %182 = vmatpush1.msra.mxu0 0.0
    %183 = vmatprep.subr.mxu0 0.0
    %184 = vmatpush1.msra.mxu0 0.0
    %185 = vmatprep.subr.mxu0 0.0
    %186 = vmatpush1.msra.mxu0 0.0
    %187 = vmatprep.subr.mxu0 0.0
    %188 = vmatpush1.msra.mxu0 0.0
    %189 = vmatprep.subr.mxu0 0.0
    %190 = vmatpush1.msra.mxu0 0.0
    %191 = vmatprep.subr.mxu0 0.0
    %192 = vmatpush1.msra.mxu0 0.0
    %193 = vmatprep.subr.mxu0 0.0
    %194 = vmatpush1.msra.mxu0 0.0
    %195 = vmatprep.subr.mxu0 0.0
    %196 = vmatpush1.msra.mxu0 0.0
    %197 = vmatprep.subr.mxu0 0.0
    %198 = vmatpush1.msra.mxu0 0.0
    %199 = vmatprep.subr.mxu0 0.0
    %200 = vmatpush1.msra.mxu0 0.0
    %201 = vmatprep.subr.mxu0 0.0
    %202 = vmatpush1.msra.mxu0 0.0
    %203 = vmatprep.subr.mxu0 0.0
    %204 = vmatpush1.msra.mxu0 0.0
    %205 = vmatprep.subr.mxu0 0.0
    %206 = vmatpush1.msra.mxu0 0.0
    %207 = vmatprep.mubr.f32.mxu0 0.0
    %208 = vmatmul.mubr.f32.gmra.mrb[0].mxu0 %v138
    %v209 = vpop.f32.mrb[0].mxu0
    %v210 = vadd.f32 %v134, %v209
    %v211 = vpop.f32.mrb[0].mxu0
    %212 = vmatprep.mubr.f32.mxu0 0.0
    %213 = vmatmul.mubr.f32.gmra.mrb[0].mxu0 %v141
    %v214 = vpop.f32.mrb[0].mxu0
    %v215 = vadd.f32 %v134, %v214
    %v216 = vpop.f32.mrb[0].mxu0
    %217 = vdwg.mxu0
    %v218 = vadd.f32 %v210, %v24
    %v219 = vadd.f32 %v215, %v25
    %v220 = vmul.f32 %v218, %v218
    %v221 = vmul.f32 %v219, %v219
    %v222 = vsel %vm37, %v220, 0.0
    %223 = vadd.xlane.f32.xlu0 %v222
    %v224 = vpop.xlane.xlu0 %223
    %v225 = vsel %vm37, %v221, 0.0
    %226 = vadd.xlane.f32.xlu0 %v225
    %v227 = vpop.xlane.xlu0 %226
    %v228 = vrcp.pop 32.0
    %v229 = vmul.f32 %v224, %v228
    %v230 = vmul.f32 %v227, %v228
    %v231 = vadd.f32 %v229, 1e-05
    %v232 = vadd.f32 %v230, 1e-05
    %v233 = vrsqrt.pop %v231
    %v234 = vrsqrt.pop %v232
    %v235 = vmul.f32 %v218, %v233
    %v236 = vmul.f32 %v219, %v234
    %v237 = vld [vmem:[%s5] sm:$0x1]
    %v239 = vlaneseq
    %v240 = vshrl.u32 %v239, 7
    %v241 = vsub.s32 0, %v240
    %v242 = vrot.slane %v237, %v241
    %v244 = vmul.f32 %v235, %v242
    %v245 = vmul.f32 %v236, %v242
    %246 = vst.msk [vmem:[#allocation2] sm:$0xff] %vm37, %v244
    %247 = vst.msk [vmem:[#allocation2 + $0x8] sm:$0xff] %vm37, %v245
    // Predicated region
    $region26: #{decoder_layer.15} parent=1 // pred_check
      _
    $region27: #{decoder_layer.15} parent=1 // pred_check_branch
      %249 = sbr.rel (0) target = $region29
    $region28: #{decoder_layer.15} parent=1 // pred_region
      %s251 = ssub.s32 256, 256
      %252 = vsyncadd [#allocation3], %s251
      %s253 = sshll.u32 [#allocation2], 4
      %s254 = int_to_ptr.vmem [resolvable:$true] %s253
      %259 = dma.vmem_to_hbm [thread:$0]  %s254, 256, %s6, [#allocation3], 128, 128, 8
    $region29: #{decoder_layer.15} parent=1 // pred_fallthru
      _
    // Predicated region
    $region30: #{decoder_layer.15} parent=1 // pred_check
      _
    $region31: #{decoder_layer.15} parent=1 // pred_check_branch
      %261 = sbr.rel (0) target = $region33
    $region32: #{decoder_layer.15} parent=1 // pred_region
      %262 = dma.done [#allocation3], 256
    $region33: #{decoder_layer.15} parent=1 // pred_fallthru
      _
    %263 = vsyncpa [#allocation3], 1

</llo_original>
